<compile_context>
chip_gen: v7x
topology: tpu7x:2x2x1
jax: 0.10.0
libtpu: 0.0.40
codegen_flags: <defaults>
</compile_context>

<pallas_src>
import functools

import numpy as np
import jax
import jax.numpy as jnp
from jax.experimental import pallas as pl
from jax.experimental.pallas import tpu as pltpu

_EPS = 1e-5


# ----------------------------- in-kernel helpers -----------------------------

def _mish(x):
    # mish(x) = x * tanh(softplus(x)) = x * (e^2 + 2e) / (e^2 + 2e + 2), e = exp(x)
    e = jnp.exp(jnp.minimum(x, 20.0))
    n = e * (e + 2.0)
    return x * n / (n + 2.0)        # exact divide (EUP slack; matches torch mish)


def _ln_channels(x, gb, eps=_EPS):
    # LayerNorm over the channel rows (axis 0) of an [C, P] tile; gb: [C, 2] = (gamma, beta).
    mu = jnp.mean(x, axis=0, keepdims=True)
    d = x - mu
    var = jnp.mean(d * d, axis=0, keepdims=True)
    return d * jax.lax.rsqrt(var + eps) * gb[:, 0:1] + gb[:, 1:2]


# ----------------------------- the fused kernel -----------------------------

def _ffc_fused_kernel(*refs, out_cl, out_cg, cg2, c4, in_cl, C, ctap, Q, Q2, enable_lfu):
    f32 = jnp.float32
    bf16 = jnp.bfloat16
    if enable_lfu:
        (cols_ref, wconvT_ref, w1T_ref, dfwd_ref, wfu_ref, dinv_ref,
         gcat_ref, wlfu_ref, dinvl_ref, w2T_ref, ln_ref, zl_ref, zg_ref) = refs
    else:
        (cols_ref, wconvT_ref, w1T_ref, dfwd_ref, wfu_ref, dinv_ref,
         w2T_ref, ln_ref, zl_ref, zg_ref) = refs
        gcat_ref = wlfu_ref = dinvl_ref = None

    # packed LayerNorm params: rows [ln1 | fu_ln | lfu_ln | lnl | lng]
    ln = ln_ref[...]
    ln1 = ln[0:cg2]
    lnfu = ln[cg2:3 * cg2]
    lnlf = ln[3 * cg2:5 * cg2]
    lnl = ln[5 * cg2:5 * cg2 + out_cl]
    lng = ln[5 * cg2 + out_cl:5 * cg2 + out_cl + out_cg]

    # ---- all spatial convs (l2l + g2l -> local out, l2g -> global out) as one
    #      bf16 MXU matmul over the pre-built im2col columns.
    cols = cols_ref[...]                                                 # [KK*C, P] bf16
    conv_t = jnp.dot(wconvT_ref[...], cols, preferred_element_type=f32)  # [out_cl+out_cg, P]
    out_l = conv_t[:out_cl, :]
    l2g = conv_t[out_cl:, :]

    # ---- SpectralTransform: conv1 (1x1) + LayerNorm(channels) + Mish ----
    # global-channel input = the centre-tap rows of the im2col columns (no extra DMA).
    xg = cols[ctap * C + in_cl:ctap * C + C, :]                          # [in_cg, P] bf16
    h = jnp.dot(w1T_ref[...], xg, preferred_element_type=f32)            # [cg2, P]
    h = _mish(_ln_channels(h, ln1))
    hb = h.astype(bf16)

    # ---- FourierUnit: fused rDFT -> one complex 1x1 conv -> LN+ReLU -> fused irDFT ----
    # TODO(synk): no FFT primitive in Pallas; (i)rDFT is done exactly with dense DFT
    # matrices (fine at 16x16; switch to separable row/col DFTs at large F,T).
    fcat = jnp.dot(hb, dfwd_ref[...], preferred_element_type=f32)        # [cg2, 2Q]
    fs = jnp.concatenate([fcat[:, :Q], fcat[:, Q:]], axis=0)             # [2cg2, Q]
    y_fu = jnp.dot(wfu_ref[...], fs.astype(bf16), preferred_element_type=f32)
    z_fu = jnp.maximum(_ln_channels(y_fu, lnfu), 0.0)                    # [2cg2, Q]
    z_fu_cat = jnp.concatenate([z_fu[:cg2, :], z_fu[cg2:, :]], axis=1).astype(bf16)
    fu_out = jnp.dot(z_fu_cat, dinv_ref[...], preferred_element_type=f32)  # [cg2, P]

    s = h + fu_out

    if enable_lfu:
        # Local Fourier Unit: quadrant split + half-size rDFT folded into ONE [P, 8*Q2]
        # matrix; channel mix as ONE [2cg2, 2cg2] matmul; iDFT + 2x2 tiling folded into
        # ONE [2*Q2, P] matrix.
        hl = hb[:c4, :]                                                  # [c4, P]
        tcat = jnp.dot(hl, gcat_ref[...], preferred_element_type=f32)    # [c4, 8*Q2]
        tstack = jnp.concatenate(
            [tcat[:, k * Q2:(k + 1) * Q2] for k in range(8)], axis=0)    # [2cg2, Q2]
        y_lf = jnp.dot(wlfu_ref[...], tstack.astype(bf16), preferred_element_type=f32)
        z_lf = jnp.maximum(_ln_channels(y_lf, lnlf), 0.0)                # [2cg2, Q2]
        z_lf_cat = jnp.concatenate([z_lf[:cg2, :], z_lf[cg2:, :]], axis=1).astype(bf16)
        s = s + jnp.dot(z_lf_cat, dinvl_ref[...], preferred_element_type=f32)  # [cg2, P]

    sp = jnp.dot(w2T_ref[...], s.astype(bf16), preferred_element_type=f32)     # [out_cg, P]
    out_g = l2g + sp

    # ---- block-level LayerNorm(channels) + Mish, fused as the kernel epilogue ----
    zl_ref[...] = _mish(_ln_channels(out_l, lnl)).astype(zl_ref.dtype)
    zg_ref[...] = _mish(_ln_channels(out_g, lng)).astype(zg_ref.dtype)


# ----------------------------- constant preparation (prepare time) -----------------------------

def _rfft2_mats(H, W):
    """Dense ortho rfft2 / irfft2 matrices over a flattened (f, t) spatial index."""
    Wh = W // 2 + 1
    f = np.arange(H).reshape(H, 1, 1, 1)
    t = np.arange(W).reshape(1, W, 1, 1)
    u = np.arange(H).reshape(1, 1, H, 1)
    v = np.arange(Wh).reshape(1, 1, 1, Wh)
    theta = 2.0 * np.pi * (f * u / H + t * v / W)
    scale = 1.0 / np.sqrt(H * W)
    dre = (np.cos(theta) * scale).reshape(H * W, H * Wh)
    dim = (-np.sin(theta) * scale).reshape(H * W, H * Wh)
    wv = np.full((Wh,), 2.0)
    wv[0] = 1.0
    if W % 2 == 0:
        wv[W // 2] = 1.0
    dire = (np.cos(theta) * scale * wv.reshape(1, 1, 1, Wh)).reshape(H * W, H * Wh).T
    diim = (-np.sin(theta) * scale * wv.reshape(1, 1, 1, Wh)).reshape(H * W, H * Wh).T
    return (dre.astype(np.float32), dim.astype(np.float32),
            dire.astype(np.float32), diim.astype(np.float32))


def _complex_conv_block(w):
    # w: [2*Cin, 2*Cout], channels interleaved as (c, {re, im}).
    # Returns the fused [[wrrT, wirT], [wriT, wiiT]] matrix ([2*Cout, 2*Cin]).
    wrrT = w[0::2, 0::2].T
    wirT = w[1::2, 0::2].T
    wriT = w[0::2, 1::2].T
    wiiT = w[1::2, 1::2].T
    return jnp.concatenate([jnp.concatenate([wrrT, wirT], axis=1),
                            jnp.concatenate([wriT, wiiT], axis=1)], axis=0)


def _deinterleave_ln(gamma, beta):
    # interleaved (c, {re, im}) params -> rows ordered [re-block ; im-block], cols (gamma, beta).
    g = jnp.concatenate([gamma[0::2], gamma[1::2]])
    b = jnp.concatenate([beta[0::2], beta[1::2]])
    return jnp.stack([g, b], axis=1)


def prepare_constants(params, *, in_channels, out_channels, ratio_gin, ratio_gout,
                      in_freq, in_time, ksize, enable_lfu=True):
    """Build all kernel-ready constant matrices once (outside the hot path)."""
    in_cg = int(in_channels * ratio_gin)
    in_cl = in_channels - in_cg
    out_cg = int(out_channels * ratio_gout)
    out_cl = out_channels - out_cg
    cg2 = out_cg // 2
    H, W = in_freq, in_time
    KK = ksize * ksize
    f32, bf16 = jnp.float32, jnp.bfloat16

    # fused conv weight: rows (tap, cin over [local | global]); cols [out_cl | out_cg(l2g)]
    l2l = params["l2l_w"].reshape(KK, in_cl, out_cl)
    g2l = params["g2l_w"].reshape(KK, in_cg, out_cl)
    l2g = params["l2g_w"].reshape(KK, in_cl, out_cg)
    w_all = jnp.zeros((KK, in_channels, out_cl + out_cg), f32)
    w_all = w_all.at[:, :in_cl, :out_cl].set(l2l)
    w_all = w_all.at[:, in_cl:, :out_cl].set(g2l)
    w_all = w_all.at[:, :in_cl, out_cl:].set(l2g)
    wconvT = w_all.reshape(KK * in_channels, out_cl + out_cg).T.astype(bf16)

    st = params["st"]

    # main FourierUnit: fused [re | im] forward DFT and [[re];[im]] inverse DFT (bf16)
    d2re, d2im, d2ire, d2iim = _rfft2_mats(H, W)
    dfwd = jnp.asarray(np.concatenate([d2re, d2im], axis=1)).astype(bf16)    # [P, 2Q]
    dinv = jnp.asarray(np.concatenate([d2ire, d2iim], axis=0)).astype(bf16)  # [2Q, P]

    consts = {
        "wconvT": wconvT,
        "w1T": st["conv1_w"].T.astype(bf16),
        "dfwd": dfwd,
        "wfu": _complex_conv_block(st["fu_w"]).astype(bf16),                 # [2cg2, 2cg2]
        "dinv": dinv,
        "w2T": st["conv2_w"].T.astype(bf16),
    }

    # all LayerNorm params packed into a single [*, 2] array (static row offsets in-kernel)
    ln_all = jnp.concatenate([
        jnp.stack([st["conv1_gamma"], st["conv1_beta"]], axis=1),
        _deinterleave_ln(st["fu_gamma"], st["fu_beta"]),
        _deinterleave_ln(st["lfu_gamma"], st["lfu_beta"]),
        jnp.stack([params["norm_l_gamma"], params["norm_l_beta"]], axis=1),
        jnp.stack([params["norm_g_gamma"], params["norm_g_beta"]], axis=1),
    ], axis=0).astype(f32)
    consts["ln_all"] = ln_all

    if enable_lfu:
        # LFU: fold the quadrant gather into the half-size forward DFT blocks
        # (ordering: re TL,BL,TR,BR then im TL,BL,TR,BR), and fold the 2x2 spatial
        # tiling into the inverse DFT.
        H2, W2 = H // 2, W // 2
        P, P2 = H * W, H2 * W2
        dl_re, dl_im, dl_ire, dl_iim = _rfft2_mats(H2, W2)
        blocks = []
        for ri_mat in (dl_re, dl_im):
            for qh, qw in ((0, 0), (1, 0), (0, 1), (1, 1)):   # TL, BL, TR, BR
                sel = np.zeros((P, P2), np.float32)
                for fq in range(H2):
                    for tq in range(W2):
                        sel[(qh * H2 + fq) * W + (qw * W2 + tq), fq * W2 + tq] = 1.0
                blocks.append(sel @ ri_mat)
        gcat = np.concatenate(blocks, axis=1)                 # [P, 8*Q2]
        tile = np.zeros((P2, P), np.float32)
        for f in range(H):
            for t in range(W):
                tile[(f % H2) * W2 + (t % W2), f * W + t] = 1.0
        dinvl = np.concatenate([dl_ire @ tile, dl_iim @ tile], axis=0)   # [2*Q2, P]
        consts["gcat"] = jnp.asarray(gcat).astype(bf16)
        consts["wlfu"] = _complex_conv_block(st["lfu_w"]).astype(bf16)
        consts["dinvl"] = jnp.asarray(dinvl).astype(bf16)
    return consts


# ----------------------------- hot-path forward -----------------------------

def ffc_block_apply(x, consts, *, in_cl, out_cl, out_cg, cg2,
                    ksize, stride, padding, enable_lfu, out_dtype=jnp.float32):
    """x: [B, C, F, T] (NCHW). Returns (z_l, z_g), both NCHW."""
    B, C, F, T = x.shape
    in_cg = C - in_cl
    Fo = (F + 2 * padding - ksize) // stride + 1
    To = (T + 2 * padding - ksize) // stride + 1
    assert (Fo, To) == (F, T) and stride == 1 and 2 * padding == ksize - 1, \
        "spectral path requires an odd-k, stride-1, spatially-preserving conv"
    if enable_lfu:
        assert cg2 % 4 == 0 and cg2 > 0 and F % 2 == 0 and T % 2 == 0
    P = F * T
    KK = ksize * ksize
    ctap = (ksize // 2) * ksize + (ksize // 2)        # centre tap == the raw input
    c4 = max(cg2 // 4, 1)

    # im2col directly in NCHW (rows = (tap, cin), lanes = flattened (f, t)); bf16 operands.
    # TODO(synk): for large F,T build the im2col in-kernel (shifted-slice taps).
    xp = jnp.pad(x, ((0, 0), (0, 0), (padding, padding), (padding, padding)))
    patches = [xp[:, :, dy:dy + F, dx:dx + T]
               for dy in range(ksize) for dx in range(ksize)]
    cols = jnp.stack(patches, axis=1).reshape(B, KK * C, P).astype(jnp.bfloat16)

    const_names = ["wconvT", "w1T", "dfwd", "wfu", "dinv"]
    if enable_lfu:
        const_names += ["gcat", "wlfu", "dinvl"]
    const_names += ["w2T", "ln_all"]
    const_ops = [consts[k] for k in const_names]

    def _full_spec(a):
        nd = a.ndim
        return pl.BlockSpec(a.shape, lambda b, _nd=nd: (0,) * _nd)

    in_specs = ([pl.BlockSpec((None, KK * C, P), lambda b: (b, 0, 0))]
                + [_full_spec(a) for a in const_ops])
    out_specs = (pl.BlockSpec((None, out_cl, P), lambda b: (b, 0, 0)),
                 pl.BlockSpec((None, out_cg, P), lambda b: (b, 0, 0)))
    out_shape = (jax.ShapeDtypeStruct((B, out_cl, P), out_dtype),
                 jax.ShapeDtypeStruct((B, out_cg, P), out_dtype))

    Q = consts["dfwd"].shape[1] // 2
    Q2 = (consts["dinvl"].shape[0] // 2) if enable_lfu else 0

    flops_b = (2 * (out_cl + out_cg) * KK * C * P
               + 2 * cg2 * in_cg * P
               + 2 * cg2 * P * 2 * Q
               + 2 * (2 * cg2) ** 2 * Q
               + 2 * cg2 * 2 * Q * P
               + 2 * out_cg * cg2 * P)
    if enable_lfu:
        flops_b += (2 * c4 * P * 8 * Q2
                    + 2 * (2 * cg2) ** 2 * Q2
                    + 2 * cg2 * 2 * Q2 * P)
    flops = B * flops_b
    transcendentals = B * (cg2 + out_cl + out_cg) * P
    bytes_accessed = (int(np.prod(cols.shape)) * 2
                      + sum(int(np.prod(a.shape)) * a.dtype.itemsize for a in const_ops)
                      + B * (out_cl + out_cg) * P * jnp.dtype(out_dtype).itemsize)

    kernel = functools.partial(_ffc_fused_kernel, out_cl=out_cl, out_cg=out_cg,
                               cg2=cg2, c4=c4, in_cl=in_cl, C=C, ctap=ctap,
                               Q=Q, Q2=Q2, enable_lfu=enable_lfu)
    z_l, z_g = pl.pallas_call(
        kernel,
        out_shape=out_shape,
        grid=(B,),
        in_specs=in_specs,
        out_specs=out_specs,
        compiler_params=pltpu.CompilerParams(dimension_semantics=("parallel",)),
        cost_estimate=pl.CostEstimate(flops=int(flops),
                                      transcendentals=int(transcendentals),
                                      bytes_accessed=int(bytes_accessed)),
    )(cols, *const_ops)
    return z_l.reshape(B, out_cl, F, T), z_g.reshape(B, out_cg, F, T)


# ----------------------------- deterministic parameter init -----------------------------

def init_params(key, in_channels, out_channels, ratio_gin, ratio_gout, ksize):
    in_cg = int(in_channels * ratio_gin)
    in_cl = in_channels - in_cg
    out_cg = int(out_channels * ratio_gout)
    out_cl = out_channels - out_cg
    cg2 = out_cg // 2
    ks = jax.random.split(key, 8)

    def w(k, shape, fan_in):
        return jax.random.normal(k, shape, jnp.float32) / jnp.sqrt(float(fan_in))

    return {
        "l2l_w": w(ks[0], (ksize * ksize * in_cl, out_cl), ksize * ksize * in_cl),
        "g2l_w": w(ks[1], (ksize * ksize * in_cg, out_cl), ksize * ksize * in_cg),
        "l2g_w": w(ks[2], (ksize * ksize * in_cl, out_cg), ksize * ksize * in_cl),
        "st": {
            "conv1_w": w(ks[3], (in_cg, cg2), in_cg),
            "conv1_gamma": jnp.ones((cg2,), jnp.float32),
            "conv1_beta": jnp.zeros((cg2,), jnp.float32),
            "fu_w": w(ks[4], (2 * cg2, 2 * cg2), 2 * cg2),
            "fu_gamma": jnp.ones((2 * cg2,), jnp.float32),
            "fu_beta": jnp.zeros((2 * cg2,), jnp.float32),
            "lfu_w": w(ks[5], (2 * cg2, 2 * cg2), 2 * cg2),
            "lfu_gamma": jnp.ones((2 * cg2,), jnp.float32),
            "lfu_beta": jnp.zeros((2 * cg2,), jnp.float32),
            "conv2_w": w(ks[6], (cg2, out_cg), cg2),
        },
        "norm_l_gamma": jnp.ones((out_cl,), jnp.float32),
        "norm_l_beta": jnp.zeros((out_cl,), jnp.float32),
        "norm_g_gamma": jnp.ones((out_cg,), jnp.float32),
        "norm_g_beta": jnp.zeros((out_cg,), jnp.float32),
    }


# ----------------------------- main -----------------------------

if __name__ == "__main__":
    # Config: in_channels=16, in_freq=in_time=16, out_channels=16,
    #         ratio_gin=ratio_gout=0.5, ksize=3, stride=1, padding=1, enable_lfu=True
    B, C, F, T = 2, 16, 16, 16
    OUT_C = 16
    RATIO_GIN = RATIO_GOUT = 0.5
    KSIZE, STRIDE, PAD = 3, 1, 1

    in_cg = int(C * RATIO_GIN)
    in_cl = C - in_cg
    out_cg = int(OUT_C * RATIO_GOUT)
    out_cl = OUT_C - out_cg
    cg2 = out_cg // 2

    key = jax.random.PRNGKey(0)
    kx, kp = jax.random.split(key)
    x = jax.random.normal(kx, (B, C, F, T), jnp.float32)
    params = init_params(kp, C, OUT_C, RATIO_GIN, RATIO_GOUT, KSIZE)

    consts = prepare_constants(params, in_channels=C, out_channels=OUT_C,
                               ratio_gin=RATIO_GIN, ratio_gout=RATIO_GOUT,
                               in_freq=F, in_time=T, ksize=KSIZE, enable_lfu=True)

    fwd = jax.jit(functools.partial(
        ffc_block_apply,
        in_cl=in_cl, out_cl=out_cl, out_cg=out_cg, cg2=cg2,
        ksize=KSIZE, stride=STRIDE, padding=PAD, enable_lfu=True))

    z_l, z_g = fwd(x, consts)
    jax.block_until_ready(z_l)
    jax.block_until_ready(z_g)

    assert z_l.shape == (B, out_cl, F, T)
    assert z_g.shape == (B, out_cg, F, T)
    assert bool(jnp.all(jnp.isfinite(z_l))) and bool(jnp.all(jnp.isfinite(z_g)))
    print("KERNEL_OK")
</pallas_src>

<mosaic_0001>
module attributes {stable_mosaic.version = 11 : i64} {
  func.func @_ffc_fused_kernel(%arg0: i32, %arg1: memref<1x144x256xbf16, #tpu.memory_space<vmem>>, %arg2: memref<16x144xbf16, #tpu.memory_space<vmem>>, %arg3: memref<4x8xbf16, #tpu.memory_space<vmem>>, %arg4: memref<256x288xbf16, #tpu.memory_space<vmem>>, %arg5: memref<8x8xbf16, #tpu.memory_space<vmem>>, %arg6: memref<288x256xbf16, #tpu.memory_space<vmem>>, %arg7: memref<256x320xbf16, #tpu.memory_space<vmem>>, %arg8: memref<8x8xbf16, #tpu.memory_space<vmem>>, %arg9: memref<80x256xbf16, #tpu.memory_space<vmem>>, %arg10: memref<8x4xbf16, #tpu.memory_space<vmem>>, %arg11: memref<36x2xf32, #tpu.memory_space<vmem>>, %arg12: memref<1x8x256xf32, #tpu.memory_space<vmem>>, %arg13: memref<1x8x256xf32, #tpu.memory_space<vmem>>) attributes {dimension_semantics = [#tpu.dimension_semantics<parallel>], iteration_bounds = array<i64: 2>, scalar_prefetch = 0 : i64, scratch_operands = 0 : i64, tpu.core_type = #tpu.core_type<tc>, window_params = [{transform_indices = @transform_0, window_bounds = array<i64: 1, 144, 256>}, {pipeline_mode = #tpu.pipeline_mode<synchronous>, transform_indices = @transform_1, window_bounds = array<i64: 16, 144>}, {pipeline_mode = #tpu.pipeline_mode<synchronous>, transform_indices = @transform_2, window_bounds = array<i64: 4, 8>}, {pipeline_mode = #tpu.pipeline_mode<synchronous>, transform_indices = @transform_3, window_bounds = array<i64: 256, 288>}, {pipeline_mode = #tpu.pipeline_mode<synchronous>, transform_indices = @transform_4, window_bounds = array<i64: 8, 8>}, {pipeline_mode = #tpu.pipeline_mode<synchronous>, transform_indices = @transform_5, window_bounds = array<i64: 288, 256>}, {pipeline_mode = #tpu.pipeline_mode<synchronous>, transform_indices = @transform_6, window_bounds = array<i64: 256, 320>}, {pipeline_mode = #tpu.pipeline_mode<synchronous>, transform_indices = @transform_7, window_bounds = array<i64: 8, 8>}, {pipeline_mode = #tpu.pipeline_mode<synchronous>, transform_indices = @transform_8, window_bounds = array<i64: 80, 256>}, {pipeline_mode = #tpu.pipeline_mode<synchronous>, transform_indices = @transform_9, window_bounds = array<i64: 8, 4>}, {pipeline_mode = #tpu.pipeline_mode<synchronous>, transform_indices = @transform_10, window_bounds = array<i64: 36, 2>}, {transform_indices = @transform_11, window_bounds = array<i64: 1, 8, 256>}, {transform_indices = @transform_12, window_bounds = array<i64: 1, 8, 256>}]} {
    %c0 = arith.constant 0 : index
    %c0_0 = arith.constant 0 : index
    %0 = vector.load %arg11[%c0, %c0_0] : memref<36x2xf32, #tpu.memory_space<vmem>>, vector<36x2xf32>
    %1 = vector.extract_strided_slice %0 {offsets = [0, 0], sizes = [4, 2], strides = [1, 1]} : vector<36x2xf32> to vector<4x2xf32>
    %2 = vector.extract_strided_slice %0 {offsets = [4, 0], sizes = [8, 2], strides = [1, 1]} : vector<36x2xf32> to vector<8x2xf32>
    %3 = vector.extract_strided_slice %0 {offsets = [12, 0], sizes = [8, 2], strides = [1, 1]} : vector<36x2xf32> to vector<8x2xf32>
    %4 = vector.extract_strided_slice %0 {offsets = [20, 0], sizes = [8, 2], strides = [1, 1]} : vector<36x2xf32> to vector<8x2xf32>
    %5 = vector.extract_strided_slice %0 {offsets = [28, 0], sizes = [8, 2], strides = [1, 1]} : vector<36x2xf32> to vector<8x2xf32>
    %c0_1 = arith.constant 0 : index
    %c0_2 = arith.constant 0 : index
    %c0_3 = arith.constant 0 : index
    %6 = vector.load %arg1[%c0_1, %c0_2, %c0_3] : memref<1x144x256xbf16, #tpu.memory_space<vmem>>, vector<1x144x256xbf16>
    %7 = vector.shape_cast %6 : vector<1x144x256xbf16> to vector<144x256xbf16>
    %c0_4 = arith.constant 0 : index
    %c0_5 = arith.constant 0 : index
    %8 = vector.load %arg2[%c0_4, %c0_5] : memref<16x144xbf16, #tpu.memory_space<vmem>>, vector<16x144xbf16>
    %cst = arith.constant dense<0.000000e+00> : vector<16x256xf32>
    %9 = tpu.matmul %8, %7, %cst {dimension_numbers = #tpu.dot_dimension_numbers<[1], [0], [0], [1], [0, 0, 1, 1], [], []>} : vector<16x144xbf16>, vector<144x256xbf16>, vector<16x256xf32> -> vector<16x256xf32>
    %10 = vector.extract_strided_slice %9 {offsets = [0, 0], sizes = [8, 256], strides = [1, 1]} : vector<16x256xf32> to vector<8x256xf32>
    %11 = vector.extract_strided_slice %9 {offsets = [8, 0], sizes = [8, 256], strides = [1, 1]} : vector<16x256xf32> to vector<8x256xf32>
    %12 = vector.extract_strided_slice %7 {offsets = [72, 0], sizes = [8, 256], strides = [1, 1]} : vector<144x256xbf16> to vector<8x256xbf16>
    %c0_6 = arith.constant 0 : index
    %c0_7 = arith.constant 0 : index
    %13 = vector.load %arg3[%c0_6, %c0_7] : memref<4x8xbf16, #tpu.memory_space<vmem>>, vector<4x8xbf16>
    %cst_8 = arith.constant dense<0.000000e+00> : vector<4x256xf32>
    %14 = tpu.matmul %13, %12, %cst_8 {dimension_numbers = #tpu.dot_dimension_numbers<[1], [0], [0], [1], [0, 0, 1, 1], [], []>} : vector<4x8xbf16>, vector<8x256xbf16>, vector<4x256xf32> -> vector<4x256xf32>
    %cst_9 = arith.constant dense<0.000000e+00> : vector<256xf32>
    %15 = vector.multi_reduction <add>, %14, %cst_9 [0] : vector<4x256xf32> to vector<256xf32>
    %16 = vector.shape_cast %15 : vector<256xf32> to vector<1x256xf32>
    %cst_10 = arith.constant 4.000000e+00 : f32
    %17 = vector.broadcast %cst_10 : f32 to vector<1x256xf32>
    %18 = arith.divf %16, %17 : vector<1x256xf32>
    %19 = vector.broadcast %18 : vector<1x256xf32> to vector<4x256xf32>
    %20 = arith.subf %14, %19 : vector<4x256xf32>
    %21 = arith.mulf %20, %20 : vector<4x256xf32>
    %cst_11 = arith.constant dense<0.000000e+00> : vector<256xf32>
    %22 = vector.multi_reduction <add>, %21, %cst_11 [0] : vector<4x256xf32> to vector<256xf32>
    %23 = vector.shape_cast %22 : vector<256xf32> to vector<1x256xf32>
    %cst_12 = arith.constant 4.000000e+00 : f32
    %24 = vector.broadcast %cst_12 : f32 to vector<1x256xf32>
    %25 = arith.divf %23, %24 : vector<1x256xf32>
    %cst_13 = arith.constant 9.99999974E-6 : f32
    %26 = vector.broadcast %cst_13 : f32 to vector<1x256xf32>
    %27 = arith.addf %25, %26 : vector<1x256xf32>
    %28 = math.rsqrt %27 : vector<1x256xf32>
    %29 = vector.broadcast %28 : vector<1x256xf32> to vector<4x256xf32>
    %30 = arith.mulf %20, %29 : vector<4x256xf32>
    %31 = vector.extract_strided_slice %1 {offsets = [0, 0], sizes = [4, 1], strides = [1, 1]} : vector<4x2xf32> to vector<4x1xf32>
    %32 = vector.broadcast %31 : vector<4x1xf32> to vector<4x256xf32>
    %33 = arith.mulf %30, %32 : vector<4x256xf32>
    %34 = vector.extract_strided_slice %1 {offsets = [0, 1], sizes = [4, 1], strides = [1, 1]} : vector<4x2xf32> to vector<4x1xf32>
    %35 = vector.broadcast %34 : vector<4x1xf32> to vector<4x256xf32>
    %36 = arith.addf %33, %35 : vector<4x256xf32>
    %cst_14 = arith.constant 2.000000e+01 : f32
    %37 = vector.broadcast %cst_14 : f32 to vector<4x256xf32>
    %38 = arith.minimumf %36, %37 : vector<4x256xf32>
    %39 = math.exp %38 : vector<4x256xf32>
    %cst_15 = arith.constant 2.000000e+00 : f32
    %40 = vector.broadcast %cst_15 : f32 to vector<4x256xf32>
    %41 = arith.addf %39, %40 : vector<4x256xf32>
    %42 = arith.mulf %39, %41 : vector<4x256xf32>
    %43 = arith.mulf %36, %42 : vector<4x256xf32>
    %cst_16 = arith.constant 2.000000e+00 : f32
    %44 = vector.broadcast %cst_16 : f32 to vector<4x256xf32>
    %45 = arith.addf %42, %44 : vector<4x256xf32>
    %46 = arith.divf %43, %45 : vector<4x256xf32>
    %47 = arith.truncf %46 : vector<4x256xf32> to vector<4x256xbf16>
    %c0_17 = arith.constant 0 : index
    %c0_18 = arith.constant 0 : index
    %48 = vector.load %arg4[%c0_17, %c0_18] : memref<256x288xbf16, #tpu.memory_space<vmem>>, vector<256x288xbf16>
    %cst_19 = arith.constant dense<0.000000e+00> : vector<4x288xf32>
    %49 = tpu.matmul %47, %48, %cst_19 {dimension_numbers = #tpu.dot_dimension_numbers<[1], [0], [0], [1], [0, 0, 1, 1], [], []>} : vector<4x256xbf16>, vector<256x288xbf16>, vector<4x288xf32> -> vector<4x288xf32>
    %50 = vector.extract_strided_slice %49 {offsets = [0, 0], sizes = [4, 144], strides = [1, 1]} : vector<4x288xf32> to vector<4x144xf32>
    %51 = vector.extract_strided_slice %49 {offsets = [0, 144], sizes = [4, 144], strides = [1, 1]} : vector<4x288xf32> to vector<4x144xf32>
    %52 = tpu.concatenate %50, %51 in 0 : vector<4x144xf32>, vector<4x144xf32> -> vector<8x144xf32>
    %c0_20 = arith.constant 0 : index
    %c0_21 = arith.constant 0 : index
    %53 = vector.load %arg5[%c0_20, %c0_21] : memref<8x8xbf16, #tpu.memory_space<vmem>>, vector<8x8xbf16>
    %54 = arith.truncf %52 : vector<8x144xf32> to vector<8x144xbf16>
    %cst_22 = arith.constant dense<0.000000e+00> : vector<8x144xf32>
    %55 = tpu.matmul %53, %54, %cst_22 {dimension_numbers = #tpu.dot_dimension_numbers<[1], [0], [0], [1], [0, 0, 1, 1], [], []>} : vector<8x8xbf16>, vector<8x144xbf16>, vector<8x144xf32> -> vector<8x144xf32>
    %cst_23 = arith.constant dense<0.000000e+00> : vector<144xf32>
    %56 = vector.multi_reduction <add>, %55, %cst_23 [0] : vector<8x144xf32> to vector<144xf32>
    %57 = vector.shape_cast %56 : vector<144xf32> to vector<1x144xf32>
    %cst_24 = arith.constant 8.000000e+00 : f32
    %58 = vector.broadcast %cst_24 : f32 to vector<1x144xf32>
    %59 = arith.divf %57, %58 : vector<1x144xf32>
    %60 = vector.broadcast %59 : vector<1x144xf32> to vector<8x144xf32>
    %61 = arith.subf %55, %60 : vector<8x144xf32>
    %62 = arith.mulf %61, %61 : vector<8x144xf32>
    %cst_25 = arith.constant dense<0.000000e+00> : vector<144xf32>
    %63 = vector.multi_reduction <add>, %62, %cst_25 [0] : vector<8x144xf32> to vector<144xf32>
    %64 = vector.shape_cast %63 : vector<144xf32> to vector<1x144xf32>
    %cst_26 = arith.constant 8.000000e+00 : f32
    %65 = vector.broadcast %cst_26 : f32 to vector<1x144xf32>
    %66 = arith.divf %64, %65 : vector<1x144xf32>
    %cst_27 = arith.constant 9.99999974E-6 : f32
    %67 = vector.broadcast %cst_27 : f32 to vector<1x144xf32>
    %68 = arith.addf %66, %67 : vector<1x144xf32>
    %69 = math.rsqrt %68 : vector<1x144xf32>
    %70 = vector.broadcast %69 : vector<1x144xf32> to vector<8x144xf32>
    %71 = arith.mulf %61, %70 : vector<8x144xf32>
    %72 = vector.extract_strided_slice %2 {offsets = [0, 0], sizes = [8, 1], strides = [1, 1]} : vector<8x2xf32> to vector<8x1xf32>
    %73 = vector.broadcast %72 : vector<8x1xf32> to vector<8x144xf32>
    %74 = arith.mulf %71, %73 : vector<8x144xf32>
    %75 = vector.extract_strided_slice %2 {offsets = [0, 1], sizes = [8, 1], strides = [1, 1]} : vector<8x2xf32> to vector<8x1xf32>
    %76 = vector.broadcast %75 : vector<8x1xf32> to vector<8x144xf32>
    %77 = arith.addf %74, %76 : vector<8x144xf32>
    %cst_28 = arith.constant 0.000000e+00 : f32
    %78 = vector.broadcast %cst_28 : f32 to vector<8x144xf32>
    %79 = arith.maximumf %77, %78 : vector<8x144xf32>
    %80 = vector.extract_strided_slice %79 {offsets = [0, 0], sizes = [4, 144], strides = [1, 1]} : vector<8x144xf32> to vector<4x144xf32>
    %81 = vector.extract_strided_slice %79 {offsets = [4, 0], sizes = [4, 144], strides = [1, 1]} : vector<8x144xf32> to vector<4x144xf32>
    %82 = tpu.concatenate %80, %81 in 1 : vector<4x144xf32>, vector<4x144xf32> -> vector<4x288xf32>
    %83 = arith.truncf %82 : vector<4x288xf32> to vector<4x288xbf16>
    %c0_29 = arith.constant 0 : index
    %c0_30 = arith.constant 0 : index
    %84 = vector.load %arg6[%c0_29, %c0_30] : memref<288x256xbf16, #tpu.memory_space<vmem>>, vector<288x256xbf16>
    %cst_31 = arith.constant dense<0.000000e+00> : vector<4x256xf32>
    %85 = tpu.matmul %83, %84, %cst_31 {dimension_numbers = #tpu.dot_dimension_numbers<[1], [0], [0], [1], [0, 0, 1, 1], [], []>} : vector<4x288xbf16>, vector<288x256xbf16>, vector<4x256xf32> -> vector<4x256xf32>
    %86 = arith.addf %46, %85 : vector<4x256xf32>
    %87 = vector.extract_strided_slice %47 {offsets = [0, 0], sizes = [1, 256], strides = [1, 1]} : vector<4x256xbf16> to vector<1x256xbf16>
    %c0_32 = arith.constant 0 : index
    %c0_33 = arith.constant 0 : index
    %88 = vector.load %arg7[%c0_32, %c0_33] : memref<256x320xbf16, #tpu.memory_space<vmem>>, vector<256x320xbf16>
    %cst_34 = arith.constant dense<0.000000e+00> : vector<1x320xf32>
    %89 = tpu.matmul %87, %88, %cst_34 {dimension_numbers = #tpu.dot_dimension_numbers<[1], [0], [0], [1], [0, 0, 1, 1], [], []>} : vector<1x256xbf16>, vector<256x320xbf16>, vector<1x320xf32> -> vector<1x320xf32>
    %90 = vector.extract_strided_slice %89 {offsets = [0, 0], sizes = [1, 40], strides = [1, 1]} : vector<1x320xf32> to vector<1x40xf32>
    %91 = vector.extract_strided_slice %89 {offsets = [0, 40], sizes = [1, 40], strides = [1, 1]} : vector<1x320xf32> to vector<1x40xf32>
    %92 = vector.extract_strided_slice %89 {offsets = [0, 80], sizes = [1, 40], strides = [1, 1]} : vector<1x320xf32> to vector<1x40xf32>
    %93 = vector.extract_strided_slice %89 {offsets = [0, 120], sizes = [1, 40], strides = [1, 1]} : vector<1x320xf32> to vector<1x40xf32>
    %94 = vector.extract_strided_slice %89 {offsets = [0, 160], sizes = [1, 40], strides = [1, 1]} : vector<1x320xf32> to vector<1x40xf32>
    %95 = vector.extract_strided_slice %89 {offsets = [0, 200], sizes = [1, 40], strides = [1, 1]} : vector<1x320xf32> to vector<1x40xf32>
    %96 = vector.extract_strided_slice %89 {offsets = [0, 240], sizes = [1, 40], strides = [1, 1]} : vector<1x320xf32> to vector<1x40xf32>
    %97 = vector.extract_strided_slice %89 {offsets = [0, 280], sizes = [1, 40], strides = [1, 1]} : vector<1x320xf32> to vector<1x40xf32>
    %98 = tpu.concatenate %90, %91, %92, %93, %94, %95, %96, %97 in 0 : vector<1x40xf32>, vector<1x40xf32>, vector<1x40xf32>, vector<1x40xf32>, vector<1x40xf32>, vector<1x40xf32>, vector<1x40xf32>, vector<1x40xf32> -> vector<8x40xf32>
    %c0_35 = arith.constant 0 : index
    %c0_36 = arith.constant 0 : index
    %99 = vector.load %arg8[%c0_35, %c0_36] : memref<8x8xbf16, #tpu.memory_space<vmem>>, vector<8x8xbf16>
    %100 = arith.truncf %98 : vector<8x40xf32> to vector<8x40xbf16>
    %cst_37 = arith.constant dense<0.000000e+00> : vector<8x40xf32>
    %101 = tpu.matmul %99, %100, %cst_37 {dimension_numbers = #tpu.dot_dimension_numbers<[1], [0], [0], [1], [0, 0, 1, 1], [], []>} : vector<8x8xbf16>, vector<8x40xbf16>, vector<8x40xf32> -> vector<8x40xf32>
    %cst_38 = arith.constant dense<0.000000e+00> : vector<40xf32>
    %102 = vector.multi_reduction <add>, %101, %cst_38 [0] : vector<8x40xf32> to vector<40xf32>
    %103 = vector.shape_cast %102 : vector<40xf32> to vector<1x40xf32>
    %cst_39 = arith.constant 8.000000e+00 : f32
    %104 = vector.broadcast %cst_39 : f32 to vector<1x40xf32>
    %105 = arith.divf %103, %104 : vector<1x40xf32>
    %106 = vector.broadcast %105 : vector<1x40xf32> to vector<8x40xf32>
    %107 = arith.subf %101, %106 : vector<8x40xf32>
    %108 = arith.mulf %107, %107 : vector<8x40xf32>
    %cst_40 = arith.constant dense<0.000000e+00> : vector<40xf32>
    %109 = vector.multi_reduction <add>, %108, %cst_40 [0] : vector<8x40xf32> to vector<40xf32>
    %110 = vector.shape_cast %109 : vector<40xf32> to vector<1x40xf32>
    %cst_41 = arith.constant 8.000000e+00 : f32
    %111 = vector.broadcast %cst_41 : f32 to vector<1x40xf32>
    %112 = arith.divf %110, %111 : vector<1x40xf32>
    %cst_42 = arith.constant 9.99999974E-6 : f32
    %113 = vector.broadcast %cst_42 : f32 to vector<1x40xf32>
    %114 = arith.addf %112, %113 : vector<1x40xf32>
    %115 = math.rsqrt %114 : vector<1x40xf32>
    %116 = vector.broadcast %115 : vector<1x40xf32> to vector<8x40xf32>
    %117 = arith.mulf %107, %116 : vector<8x40xf32>
    %118 = vector.extract_strided_slice %3 {offsets = [0, 0], sizes = [8, 1], strides = [1, 1]} : vector<8x2xf32> to vector<8x1xf32>
    %119 = vector.broadcast %118 : vector<8x1xf32> to vector<8x40xf32>
    %120 = arith.mulf %117, %119 : vector<8x40xf32>
    %121 = vector.extract_strided_slice %3 {offsets = [0, 1], sizes = [8, 1], strides = [1, 1]} : vector<8x2xf32> to vector<8x1xf32>
    %122 = vector.broadcast %121 : vector<8x1xf32> to vector<8x40xf32>
    %123 = arith.addf %120, %122 : vector<8x40xf32>
    %cst_43 = arith.constant 0.000000e+00 : f32
    %124 = vector.broadcast %cst_43 : f32 to vector<8x40xf32>
    %125 = arith.maximumf %123, %124 : vector<8x40xf32>
    %126 = vector.extract_strided_slice %125 {offsets = [0, 0], sizes = [4, 40], strides = [1, 1]} : vector<8x40xf32> to vector<4x40xf32>
    %127 = vector.extract_strided_slice %125 {offsets = [4, 0], sizes = [4, 40], strides = [1, 1]} : vector<8x40xf32> to vector<4x40xf32>
    %128 = tpu.concatenate %126, %127 in 1 : vector<4x40xf32>, vector<4x40xf32> -> vector<4x80xf32>
    %129 = arith.truncf %128 : vector<4x80xf32> to vector<4x80xbf16>
    %c0_44 = arith.constant 0 : index
    %c0_45 = arith.constant 0 : index
    %130 = vector.load %arg9[%c0_44, %c0_45] : memref<80x256xbf16, #tpu.memory_space<vmem>>, vector<80x256xbf16>
    %cst_46 = arith.constant dense<0.000000e+00> : vector<4x256xf32>
    %131 = tpu.matmul %129, %130, %cst_46 {dimension_numbers = #tpu.dot_dimension_numbers<[1], [0], [0], [1], [0, 0, 1, 1], [], []>} : vector<4x80xbf16>, vector<80x256xbf16>, vector<4x256xf32> -> vector<4x256xf32>
    %132 = arith.addf %86, %131 : vector<4x256xf32>
    %c0_47 = arith.constant 0 : index
    %c0_48 = arith.constant 0 : index
    %133 = vector.load %arg10[%c0_47, %c0_48] : memref<8x4xbf16, #tpu.memory_space<vmem>>, vector<8x4xbf16>
    %134 = arith.truncf %132 : vector<4x256xf32> to vector<4x256xbf16>
    %cst_49 = arith.constant dense<0.000000e+00> : vector<8x256xf32>
    %135 = tpu.matmul %133, %134, %cst_49 {dimension_numbers = #tpu.dot_dimension_numbers<[1], [0], [0], [1], [0, 0, 1, 1], [], []>} : vector<8x4xbf16>, vector<4x256xbf16>, vector<8x256xf32> -> vector<8x256xf32>
    %136 = arith.addf %11, %135 : vector<8x256xf32>
    %cst_50 = arith.constant dense<0.000000e+00> : vector<256xf32>
    %137 = vector.multi_reduction <add>, %10, %cst_50 [0] : vector<8x256xf32> to vector<256xf32>
    %138 = vector.shape_cast %137 : vector<256xf32> to vector<1x256xf32>
    %cst_51 = arith.constant 8.000000e+00 : f32
    %139 = vector.broadcast %cst_51 : f32 to vector<1x256xf32>
    %140 = arith.divf %138, %139 : vector<1x256xf32>
    %141 = vector.broadcast %140 : vector<1x256xf32> to vector<8x256xf32>
    %142 = arith.subf %10, %141 : vector<8x256xf32>
    %143 = arith.mulf %142, %142 : vector<8x256xf32>
    %cst_52 = arith.constant dense<0.000000e+00> : vector<256xf32>
    %144 = vector.multi_reduction <add>, %143, %cst_52 [0] : vector<8x256xf32> to vector<256xf32>
    %145 = vector.shape_cast %144 : vector<256xf32> to vector<1x256xf32>
    %cst_53 = arith.constant 8.000000e+00 : f32
    %146 = vector.broadcast %cst_53 : f32 to vector<1x256xf32>
    %147 = arith.divf %145, %146 : vector<1x256xf32>
    %cst_54 = arith.constant 9.99999974E-6 : f32
    %148 = vector.broadcast %cst_54 : f32 to vector<1x256xf32>
    %149 = arith.addf %147, %148 : vector<1x256xf32>
    %150 = math.rsqrt %149 : vector<1x256xf32>
    %151 = vector.broadcast %150 : vector<1x256xf32> to vector<8x256xf32>
    %152 = arith.mulf %142, %151 : vector<8x256xf32>
    %153 = vector.extract_strided_slice %4 {offsets = [0, 0], sizes = [8, 1], strides = [1, 1]} : vector<8x2xf32> to vector<8x1xf32>
    %154 = vector.broadcast %153 : vector<8x1xf32> to vector<8x256xf32>
    %155 = arith.mulf %152, %154 : vector<8x256xf32>
    %156 = vector.extract_strided_slice %4 {offsets = [0, 1], sizes = [8, 1], strides = [1, 1]} : vector<8x2xf32> to vector<8x1xf32>
    %157 = vector.broadcast %156 : vector<8x1xf32> to vector<8x256xf32>
    %158 = arith.addf %155, %157 : vector<8x256xf32>
    %cst_55 = arith.constant 2.000000e+01 : f32
    %159 = vector.broadcast %cst_55 : f32 to vector<8x256xf32>
    %160 = arith.minimumf %158, %159 : vector<8x256xf32>
    %161 = math.exp %160 : vector<8x256xf32>
    %cst_56 = arith.constant 2.000000e+00 : f32
    %162 = vector.broadcast %cst_56 : f32 to vector<8x256xf32>
    %163 = arith.addf %161, %162 : vector<8x256xf32>
    %164 = arith.mulf %161, %163 : vector<8x256xf32>
    %165 = arith.mulf %158, %164 : vector<8x256xf32>
    %cst_57 = arith.constant 2.000000e+00 : f32
    %166 = vector.broadcast %cst_57 : f32 to vector<8x256xf32>
    %167 = arith.addf %164, %166 : vector<8x256xf32>
    %168 = arith.divf %165, %167 : vector<8x256xf32>
    %c0_58 = arith.constant 0 : index
    %c0_59 = arith.constant 0 : index
    %c0_60 = arith.constant 0 : index
    %169 = vector.load %arg12[%c0_58, %c0_59, %c0_60] : memref<1x8x256xf32, #tpu.memory_space<vmem>>, vector<1x8x256xf32>
    %170 = vector.shape_cast %169 : vector<1x8x256xf32> to vector<8x256xf32>
    %171 = vector.shape_cast %168 : vector<8x256xf32> to vector<1x8x256xf32>
    tpu.vector_store %arg12[%c0_58, %c0_59, %c0_60], %171 {strides = array<i32>} : memref<1x8x256xf32, #tpu.memory_space<vmem>>, vector<1x8x256xf32>,
    %cst_61 = arith.constant dense<0.000000e+00> : vector<256xf32>
    %172 = vector.multi_reduction <add>, %136, %cst_61 [0] : vector<8x256xf32> to vector<256xf32>
    %173 = vector.shape_cast %172 : vector<256xf32> to vector<1x256xf32>
    %cst_62 = arith.constant 8.000000e+00 : f32
    %174 = vector.broadcast %cst_62 : f32 to vector<1x256xf32>
    %175 = arith.divf %173, %174 : vector<1x256xf32>
    %176 = vector.broadcast %175 : vector<1x256xf32> to vector<8x256xf32>
    %177 = arith.subf %136, %176 : vector<8x256xf32>
    %178 = arith.mulf %177, %177 : vector<8x256xf32>
    %cst_63 = arith.constant dense<0.000000e+00> : vector<256xf32>
    %179 = vector.multi_reduction <add>, %178, %cst_63 [0] : vector<8x256xf32> to vector<256xf32>
    %180 = vector.shape_cast %179 : vector<256xf32> to vector<1x256xf32>
    %cst_64 = arith.constant 8.000000e+00 : f32
    %181 = vector.broadcast %cst_64 : f32 to vector<1x256xf32>
    %182 = arith.divf %180, %181 : vector<1x256xf32>
    %cst_65 = arith.constant 9.99999974E-6 : f32
    %183 = vector.broadcast %cst_65 : f32 to vector<1x256xf32>
    %184 = arith.addf %182, %183 : vector<1x256xf32>
    %185 = math.rsqrt %184 : vector<1x256xf32>
    %186 = vector.broadcast %185 : vector<1x256xf32> to vector<8x256xf32>
    %187 = arith.mulf %177, %186 : vector<8x256xf32>
    %188 = vector.extract_strided_slice %5 {offsets = [0, 0], sizes = [8, 1], strides = [1, 1]} : vector<8x2xf32> to vector<8x1xf32>
    %189 = vector.broadcast %188 : vector<8x1xf32> to vector<8x256xf32>
    %190 = arith.mulf %187, %189 : vector<8x256xf32>
    %191 = vector.extract_strided_slice %5 {offsets = [0, 1], sizes = [8, 1], strides = [1, 1]} : vector<8x2xf32> to vector<8x1xf32>
    %192 = vector.broadcast %191 : vector<8x1xf32> to vector<8x256xf32>
    %193 = arith.addf %190, %192 : vector<8x256xf32>
    %cst_66 = arith.constant 2.000000e+01 : f32
    %194 = vector.broadcast %cst_66 : f32 to vector<8x256xf32>
    %195 = arith.minimumf %193, %194 : vector<8x256xf32>
    %196 = math.exp %195 : vector<8x256xf32>
    %cst_67 = arith.constant 2.000000e+00 : f32
    %197 = vector.broadcast %cst_67 : f32 to vector<8x256xf32>
    %198 = arith.addf %196, %197 : vector<8x256xf32>
    %199 = arith.mulf %196, %198 : vector<8x256xf32>
    %200 = arith.mulf %193, %199 : vector<8x256xf32>
    %cst_68 = arith.constant 2.000000e+00 : f32
    %201 = vector.broadcast %cst_68 : f32 to vector<8x256xf32>
    %202 = arith.addf %199, %201 : vector<8x256xf32>
    %203 = arith.divf %200, %202 : vector<8x256xf32>
    %c0_69 = arith.constant 0 : index
    %c0_70 = arith.constant 0 : index
    %c0_71 = arith.constant 0 : index
    %204 = vector.load %arg13[%c0_69, %c0_70, %c0_71] : memref<1x8x256xf32, #tpu.memory_space<vmem>>, vector<1x8x256xf32>
    %205 = vector.shape_cast %204 : vector<1x8x256xf32> to vector<8x256xf32>
    %206 = vector.shape_cast %203 : vector<8x256xf32> to vector<1x8x256xf32>
    tpu.vector_store %arg13[%c0_69, %c0_70, %c0_71], %206 {strides = array<i32>} : memref<1x8x256xf32, #tpu.memory_space<vmem>>, vector<1x8x256xf32>,
    return
  }
  func.func @transform_0(%arg0: i32) -> (i32, i32, i32) {
    %c0_i32 = arith.constant 0 : i32
    %c0_i32_0 = arith.constant 0 : i32
    %c0_i32_1 = arith.constant 0 : i32
    return %arg0, %c0_i32, %c0_i32_0 : i32, i32, i32
  }
  func.func @transform_1(%arg0: i32) -> (i32, i32) {
    %c0_i32 = arith.constant 0 : i32
    %c0_i32_0 = arith.constant 0 : i32
    %c0_i32_1 = arith.constant 0 : i32
    return %c0_i32, %c0_i32_0 : i32, i32
  }
  func.func @transform_2(%arg0: i32) -> (i32, i32) {
    %c0_i32 = arith.constant 0 : i32
    %c0_i32_0 = arith.constant 0 : i32
    %c0_i32_1 = arith.constant 0 : i32
    return %c0_i32, %c0_i32_0 : i32, i32
  }
  func.func @transform_3(%arg0: i32) -> (i32, i32) {
    %c0_i32 = arith.constant 0 : i32
    %c0_i32_0 = arith.constant 0 : i32
    %c0_i32_1 = arith.constant 0 : i32
    return %c0_i32, %c0_i32_0 : i32, i32
  }
  func.func @transform_4(%arg0: i32) -> (i32, i32) {
    %c0_i32 = arith.constant 0 : i32
    %c0_i32_0 = arith.constant 0 : i32
    %c0_i32_1 = arith.constant 0 : i32
    return %c0_i32, %c0_i32_0 : i32, i32
  }
  func.func @transform_5(%arg0: i32) -> (i32, i32) {
    %c0_i32 = arith.constant 0 : i32
    %c0_i32_0 = arith.constant 0 : i32
    %c0_i32_1 = arith.constant 0 : i32
    return %c0_i32, %c0_i32_0 : i32, i32
  }
  func.func @transform_6(%arg0: i32) -> (i32, i32) {
    %c0_i32 = arith.constant 0 : i32
    %c0_i32_0 = arith.constant 0 : i32
    %c0_i32_1 = arith.constant 0 : i32
    return %c0_i32, %c0_i32_0 : i32, i32
  }
  func.func @transform_7(%arg0: i32) -> (i32, i32) {
    %c0_i32 = arith.constant 0 : i32
    %c0_i32_0 = arith.constant 0 : i32
    %c0_i32_1 = arith.constant 0 : i32
    return %c0_i32, %c0_i32_0 : i32, i32
  }
  func.func @transform_8(%arg0: i32) -> (i32, i32) {
    %c0_i32 = arith.constant 0 : i32
    %c0_i32_0 = arith.constant 0 : i32
    %c0_i32_1 = arith.constant 0 : i32
    return %c0_i32, %c0_i32_0 : i32, i32
  }
  func.func @transform_9(%arg0: i32) -> (i32, i32) {
    %c0_i32 = arith.constant 0 : i32
    %c0_i32_0 = arith.constant 0 : i32
    %c0_i32_1 = arith.constant 0 : i32
    return %c0_i32, %c0_i32_0 : i32, i32
  }
  func.func @transform_10(%arg0: i32) -> (i32, i32) {
    %c0_i32 = arith.constant 0 : i32
    %c0_i32_0 = arith.constant 0 : i32
    %c0_i32_1 = arith.constant 0 : i32
    return %c0_i32, %c0_i32_0 : i32, i32
  }
  func.func @transform_11(%arg0: i32) -> (i32, i32, i32) {
    %c0_i32 = arith.constant 0 : i32
    %c0_i32_0 = arith.constant 0 : i32
    %c0_i32_1 = arith.constant 0 : i32
    return %arg0, %c0_i32, %c0_i32_0 : i32, i32, i32
  }
  func.func @transform_12(%arg0: i32) -> (i32, i32, i32) {
    %c0_i32 = arith.constant 0 : i32
    %c0_i32_0 = arith.constant 0 : i32
    %c0_i32_1 = arith.constant 0 : i32
    return %arg0, %c0_i32, %c0_i32_0 : i32, i32, i32
  }
}

</mosaic_0001>

<llo_original>
// kernel: ffc_block_apply.1
$region0: #{ffc_block_apply.1}
  #allocation0 [shape = 'u32[]', space=smem, size = 0x4, offset = 0x4, fixed_abs, tag = 'smem constant byte address 0x4 - core index']
  #allocation1 [shape = 'u32[144,128]{1,0:T(1,128)}', space=vmem, size = 0x12000, scoped, tag = 'internal scratch']
  %s0 = inlined_call_operand.vmem [shape: bf16[2,144,256], index: 0, kind: input, shape index: {}]
  %s1 = inlined_call_operand.vmem [shape: bf16[16,144], index: 1, kind: input, shape index: {}]
  %s2 = inlined_call_operand.vmem [shape: bf16[4,8], index: 2, kind: input, shape index: {}]
  %s3 = inlined_call_operand.vmem [shape: bf16[256,288], index: 3, kind: input, shape index: {}]
  %s4 = inlined_call_operand.vmem [shape: bf16[8,8], index: 4, kind: input, shape index: {}]
  %s5 = inlined_call_operand.vmem [shape: bf16[288,256], index: 5, kind: input, shape index: {}]
  %s6 = inlined_call_operand.vmem [shape: bf16[256,320], index: 6, kind: input, shape index: {}]
  %s7 = inlined_call_operand.vmem [shape: bf16[8,8], index: 7, kind: input, shape index: {}]
  %s8 = inlined_call_operand.vmem [shape: bf16[80,256], index: 8, kind: input, shape index: {}]
  %s9 = inlined_call_operand.vmem [shape: bf16[8,4], index: 9, kind: input, shape index: {}]
  %s10 = inlined_call_operand.vmem [shape: f32[36,2], index: 10, kind: input, shape index: {}]
  %s11 = inlined_call_operand.vmem [shape: f32[2,8,256], index: 11, kind: output, shape index: {0}]
  %s12 = inlined_call_operand.vmem [shape: f32[2,8,256], index: 12, kind: output, shape index: {1}]
  %13 = xla_tuple %s11, %s12
  %s14 = sld [smem:[#allocation0]]
  $region85: #{ffc_block_apply.1} parent=0
    _
  %s16 = ssub.s32 1, %s14
  %s17 = scalar_select 0, %s16, %s14
  loop: start=0, step=1, limit=4
  $region2: #{ffc_block_apply.1} parent=0 // loop_pre_header
    _
  $region3: #{ffc_block_apply.1} parent=0 // loop_header
    %s19 = sphi 0, %s23
    %p20 = scmp.ge.s32.totalorder %s19, 4
    %s29 = sphi 0, %s31
    %s32 = sphi 0, %s29
    %s33 = sphi 0, %s32
    %s49 = sphi 0, %s33
    %s53 = sphi 0, %s53
    %s55 = sphi 0, %s53
    %s56 = sphi 0, %s55
    %s70 = sphi 0, %s56
    %s74 = sphi 0, %s74
    %s76 = sphi 0, %s74
    %s77 = sphi 0, %s76
    %s91 = sphi 0, %s77
    %s95 = sphi 0, %s95
    %s97 = sphi 0, %s95
    %s98 = sphi 0, %s97
    %s112 = sphi 0, %s98
    %s116 = sphi 0, %s116
    %s118 = sphi 0, %s116
    %s119 = sphi 0, %s118
    %s133 = sphi 0, %s119
    %s137 = sphi 0, %s137
    %s139 = sphi 0, %s137
    %s140 = sphi 0, %s139
    %s154 = sphi 0, %s140
    %s158 = sphi 0, %s158
    %s160 = sphi 0, %s158
    %s161 = sphi 0, %s160
    %s175 = sphi 0, %s161
    %s179 = sphi 0, %s179
    %s181 = sphi 0, %s179
    %s182 = sphi 0, %s181
    %s196 = sphi 0, %s182
    %s200 = sphi 0, %s200
    %s202 = sphi 0, %s200
    %s203 = sphi 0, %s202
    %s217 = sphi 0, %s203
    %s221 = sphi 0, %s221
    %s223 = sphi 0, %s221
    %s224 = sphi 0, %s223
    %s238 = sphi 0, %s224
    %s242 = sphi 0, %s242
    %s244 = sphi 0, %s242
    %s245 = sphi 0, %s244
    %s259 = sphi 0, %s245
    %s265 = sphi 0, %s267
    %s268 = sphi 0, %s265
    %s269 = sphi 0, %s268
    %s285 = sphi 0, %s269
    %s291 = sphi 0, %s293
    %s294 = sphi 0, %s291
    %s295 = sphi 0, %s294
    %s311 = sphi 0, %s295
  $region4: #{ffc_block_apply.1} parent=0 // loop_header_branch
    %22 = sbr.rel (%p20) target = $region8
  $region5: #{ffc_block_apply.1} parent=0 // loop_body
    %s24 = ssub.s32 %s19, 1
    %s25 = ssub.s32 %s19, 2
    %s26 = sadd.s32 %s19, 1
    %s27 = ssub.s32 %s19, %s26
    %p28 = scmp.eq.s32.totalorder %s27, 0
    %s30 = sadd.s32 %s29, 1
    %s31 = scalar_select %p28, %s29, %s30
    %p34 = pneg %p28
    %p35 = scmp.eq.s32.totalorder %s19, 1
    %p36 = por %p34, %p35
    %p37 = scmp.ne.s32.totalorder %s29, %s32
    %p38 = scmp.eq.s32.totalorder %s19, 0
    %p39 = por %p37, %p38
    %p40 = scmp.ne.s32.totalorder %s29, %s32
    %p41 = scmp.eq.s32.totalorder %s24, 1
    %p42 = por %p40, %p41
    %p43 = scmp.ne.s32.totalorder %s32, %s33
    %p44 = scmp.eq.s32.totalorder %s24, 0
    %p45 = por %p43, %p44
    %p46 = scmp.ne.s32.totalorder %s32, %s33
    %p47 = scmp.eq.s32.totalorder %s25, 1
    %p48 = por %p46, %p47
    %p50 = scmp.ne.s32.totalorder %s33, %s49
    %p51 = scmp.eq.s32.totalorder %s25, 0
    %p52 = por %p50, %p51
    %s54 = sadd.s32 %s53, 1
    %p57 = scmp.eq.s32.totalorder %s19, 1
    %p58 = scmp.ne.s32.totalorder %s53, %s55
    %p59 = scmp.eq.s32.totalorder %s19, 0
    %p60 = por %p58, %p59
    %p61 = scmp.ne.s32.totalorder %s53, %s55
    %p62 = scmp.eq.s32.totalorder %s24, 1
    %p63 = por %p61, %p62
    %p64 = scmp.ne.s32.totalorder %s55, %s56
    %p65 = scmp.eq.s32.totalorder %s24, 0
    %p66 = por %p64, %p65
    %p67 = scmp.ne.s32.totalorder %s55, %s56
    %p68 = scmp.eq.s32.totalorder %s25, 1
    %p69 = por %p67, %p68
    %p71 = scmp.ne.s32.totalorder %s56, %s70
    %p72 = scmp.eq.s32.totalorder %s25, 0
    %p73 = por %p71, %p72
    %s75 = sadd.s32 %s74, 1
    %p78 = scmp.eq.s32.totalorder %s19, 1
    %p79 = scmp.ne.s32.totalorder %s74, %s76
    %p80 = scmp.eq.s32.totalorder %s19, 0
    %p81 = por %p79, %p80
    %p82 = scmp.ne.s32.totalorder %s74, %s76
    %p83 = scmp.eq.s32.totalorder %s24, 1
    %p84 = por %p82, %p83
    %p85 = scmp.ne.s32.totalorder %s76, %s77
    %p86 = scmp.eq.s32.totalorder %s24, 0
    %p87 = por %p85, %p86
    %p88 = scmp.ne.s32.totalorder %s76, %s77
    %p89 = scmp.eq.s32.totalorder %s25, 1
    %p90 = por %p88, %p89
    %p92 = scmp.ne.s32.totalorder %s77, %s91
    %p93 = scmp.eq.s32.totalorder %s25, 0
    %p94 = por %p92, %p93
    %s96 = sadd.s32 %s95, 1
    %p99 = scmp.eq.s32.totalorder %s19, 1
    %p100 = scmp.ne.s32.totalorder %s95, %s97
    %p101 = scmp.eq.s32.totalorder %s19, 0
    %p102 = por %p100, %p101
    %p103 = scmp.ne.s32.totalorder %s95, %s97
    %p104 = scmp.eq.s32.totalorder %s24, 1
    %p105 = por %p103, %p104
    %p106 = scmp.ne.s32.totalorder %s97, %s98
    %p107 = scmp.eq.s32.totalorder %s24, 0
    %p108 = por %p106, %p107
    %p109 = scmp.ne.s32.totalorder %s97, %s98
    %p110 = scmp.eq.s32.totalorder %s25, 1
    %p111 = por %p109, %p110
    %p113 = scmp.ne.s32.totalorder %s98, %s112
    %p114 = scmp.eq.s32.totalorder %s25, 0
    %p115 = por %p113, %p114
    %s117 = sadd.s32 %s116, 1
    %p120 = scmp.eq.s32.totalorder %s19, 1
    %p121 = scmp.ne.s32.totalorder %s116, %s118
    %p122 = scmp.eq.s32.totalorder %s19, 0
    %p123 = por %p121, %p122
    %p124 = scmp.ne.s32.totalorder %s116, %s118
    %p125 = scmp.eq.s32.totalorder %s24, 1
    %p126 = por %p124, %p125
    %p127 = scmp.ne.s32.totalorder %s118, %s119
    %p128 = scmp.eq.s32.totalorder %s24, 0
    %p129 = por %p127, %p128
    %p130 = scmp.ne.s32.totalorder %s118, %s119
    %p131 = scmp.eq.s32.totalorder %s25, 1
    %p132 = por %p130, %p131
    %p134 = scmp.ne.s32.totalorder %s119, %s133
    %p135 = scmp.eq.s32.totalorder %s25, 0
    %p136 = por %p134, %p135
    %s138 = sadd.s32 %s137, 1
    %p141 = scmp.eq.s32.totalorder %s19, 1
    %p142 = scmp.ne.s32.totalorder %s137, %s139
    %p143 = scmp.eq.s32.totalorder %s19, 0
    %p144 = por %p142, %p143
    %p145 = scmp.ne.s32.totalorder %s137, %s139
    %p146 = scmp.eq.s32.totalorder %s24, 1
    %p147 = por %p145, %p146
    %p148 = scmp.ne.s32.totalorder %s139, %s140
    %p149 = scmp.eq.s32.totalorder %s24, 0
    %p150 = por %p148, %p149
    %p151 = scmp.ne.s32.totalorder %s139, %s140
    %p152 = scmp.eq.s32.totalorder %s25, 1
    %p153 = por %p151, %p152
    %p155 = scmp.ne.s32.totalorder %s140, %s154
    %p156 = scmp.eq.s32.totalorder %s25, 0
    %p157 = por %p155, %p156
    %s159 = sadd.s32 %s158, 1
    %p162 = scmp.eq.s32.totalorder %s19, 1
    %p163 = scmp.ne.s32.totalorder %s158, %s160
    %p164 = scmp.eq.s32.totalorder %s19, 0
    %p165 = por %p163, %p164
    %p166 = scmp.ne.s32.totalorder %s158, %s160
    %p167 = scmp.eq.s32.totalorder %s24, 1
    %p168 = por %p166, %p167
    %p169 = scmp.ne.s32.totalorder %s160, %s161
    %p170 = scmp.eq.s32.totalorder %s24, 0
    %p171 = por %p169, %p170
    %p172 = scmp.ne.s32.totalorder %s160, %s161
    %p173 = scmp.eq.s32.totalorder %s25, 1
    %p174 = por %p172, %p173
    %p176 = scmp.ne.s32.totalorder %s161, %s175
    %p177 = scmp.eq.s32.totalorder %s25, 0
    %p178 = por %p176, %p177
    %s180 = sadd.s32 %s179, 1
    %p183 = scmp.eq.s32.totalorder %s19, 1
    %p184 = scmp.ne.s32.totalorder %s179, %s181
    %p185 = scmp.eq.s32.totalorder %s19, 0
    %p186 = por %p184, %p185
    %p187 = scmp.ne.s32.totalorder %s179, %s181
    %p188 = scmp.eq.s32.totalorder %s24, 1
    %p189 = por %p187, %p188
    %p190 = scmp.ne.s32.totalorder %s181, %s182
    %p191 = scmp.eq.s32.totalorder %s24, 0
    %p192 = por %p190, %p191
    %p193 = scmp.ne.s32.totalorder %s181, %s182
    %p194 = scmp.eq.s32.totalorder %s25, 1
    %p195 = por %p193, %p194
    %p197 = scmp.ne.s32.totalorder %s182, %s196
    %p198 = scmp.eq.s32.totalorder %s25, 0
    %p199 = por %p197, %p198
    %s201 = sadd.s32 %s200, 1
    %p204 = scmp.eq.s32.totalorder %s19, 1
    %p205 = scmp.ne.s32.totalorder %s200, %s202
    %p206 = scmp.eq.s32.totalorder %s19, 0
    %p207 = por %p205, %p206
    %p208 = scmp.ne.s32.totalorder %s200, %s202
    %p209 = scmp.eq.s32.totalorder %s24, 1
    %p210 = por %p208, %p209
    %p211 = scmp.ne.s32.totalorder %s202, %s203
    %p212 = scmp.eq.s32.totalorder %s24, 0
    %p213 = por %p211, %p212
    %p214 = scmp.ne.s32.totalorder %s202, %s203
    %p215 = scmp.eq.s32.totalorder %s25, 1
    %p216 = por %p214, %p215
    %p218 = scmp.ne.s32.totalorder %s203, %s217
    %p219 = scmp.eq.s32.totalorder %s25, 0
    %p220 = por %p218, %p219
    %s222 = sadd.s32 %s221, 1
    %p225 = scmp.eq.s32.totalorder %s19, 1
    %p226 = scmp.ne.s32.totalorder %s221, %s223
    %p227 = scmp.eq.s32.totalorder %s19, 0
    %p228 = por %p226, %p227
    %p229 = scmp.ne.s32.totalorder %s221, %s223
    %p230 = scmp.eq.s32.totalorder %s24, 1
    %p231 = por %p229, %p230
    %p232 = scmp.ne.s32.totalorder %s223, %s224
    %p233 = scmp.eq.s32.totalorder %s24, 0
    %p234 = por %p232, %p233
    %p235 = scmp.ne.s32.totalorder %s223, %s224
    %p236 = scmp.eq.s32.totalorder %s25, 1
    %p237 = por %p235, %p236
    %p239 = scmp.ne.s32.totalorder %s224, %s238
    %p240 = scmp.eq.s32.totalorder %s25, 0
    %p241 = por %p239, %p240
    %s243 = sadd.s32 %s242, 1
    %p246 = scmp.eq.s32.totalorder %s19, 1
    %p247 = scmp.ne.s32.totalorder %s242, %s244
    %p248 = scmp.eq.s32.totalorder %s19, 0
    %p249 = por %p247, %p248
    %p250 = scmp.ne.s32.totalorder %s242, %s244
    %p251 = scmp.eq.s32.totalorder %s24, 1
    %p252 = por %p250, %p251
    %p253 = scmp.ne.s32.totalorder %s244, %s245
    %p254 = scmp.eq.s32.totalorder %s24, 0
    %p255 = por %p253, %p254
    %p256 = scmp.ne.s32.totalorder %s244, %s245
    %p257 = scmp.eq.s32.totalorder %s25, 1
    %p258 = por %p256, %p257
    %p260 = scmp.ne.s32.totalorder %s245, %s259
    %p261 = scmp.eq.s32.totalorder %s25, 0
    %p262 = por %p260, %p261
    %s263 = ssub.s32 %s19, %s26
    %p264 = scmp.eq.s32.totalorder %s263, 0
    %s266 = sadd.s32 %s265, 1
    %s267 = scalar_select %p264, %s265, %s266
    %p270 = pneg %p264
    %p271 = scmp.eq.s32.totalorder %s19, 1
    %p272 = por %p270, %p271
    %p273 = scmp.ne.s32.totalorder %s265, %s268
    %p274 = scmp.eq.s32.totalorder %s19, 0
    %p275 = por %p273, %p274
    %p276 = scmp.ne.s32.totalorder %s265, %s268
    %p277 = scmp.eq.s32.totalorder %s24, 1
    %p278 = por %p276, %p277
    %p279 = scmp.ne.s32.totalorder %s268, %s269
    %p280 = scmp.eq.s32.totalorder %s24, 0
    %p281 = por %p279, %p280
    %p282 = scmp.ne.s32.totalorder %s268, %s269
    %p283 = scmp.eq.s32.totalorder %s25, 1
    %p284 = por %p282, %p283
    %p286 = scmp.ne.s32.totalorder %s269, %s285
    %p287 = scmp.eq.s32.totalorder %s25, 0
    %p288 = por %p286, %p287
    %s289 = ssub.s32 %s19, %s26
    %p290 = scmp.eq.s32.totalorder %s289, 0
    %s292 = sadd.s32 %s291, 1
    %s293 = scalar_select %p290, %s291, %s292
    %p296 = pneg %p290
    %p297 = scmp.eq.s32.totalorder %s19, 1
    %p298 = por %p296, %p297
    %p299 = scmp.ne.s32.totalorder %s291, %s294
    %p300 = scmp.eq.s32.totalorder %s19, 0
    %p301 = por %p299, %p300
    %p302 = scmp.ne.s32.totalorder %s291, %s294
    %p303 = scmp.eq.s32.totalorder %s24, 1
    %p304 = por %p302, %p303
    %p305 = scmp.ne.s32.totalorder %s294, %s295
    %p306 = scmp.eq.s32.totalorder %s24, 0
    %p307 = por %p305, %p306
    %p308 = scmp.ne.s32.totalorder %s294, %s295
    %p309 = scmp.eq.s32.totalorder %s25, 1
    %p310 = por %p308, %p309
    %p312 = scmp.ne.s32.totalorder %s295, %s311
    %p313 = scmp.eq.s32.totalorder %s25, 0
    %p314 = por %p312, %p313
    %p315 = scmp.le.s32.totalorder 1, %s19
    %p316 = scmp.lt.s32.totalorder %s19, 3
    %p317 = pnand %p315, %p316
    %p318 = pneg %p317
    // Predicated region
    $region9: #{ffc_block_apply.1} parent=5 // pred_check
      _
    $region10: #{ffc_block_apply.1} parent=5 // pred_check_branch
      %320 = sbr.rel (%p317) target = $region12
    $region11: #{ffc_block_apply.1} parent=5 // pred_region
      %s321 = ssub.s32 %s19, 1
      // Predicated region
      $region13: #{ffc_block_apply.1} parent=11 // pred_check
        %p322 = pneg %p66
      $region14: #{ffc_block_apply.1} parent=11 // pred_check_branch
        %324 = sbr.rel (%p322) target = $region16
      $region15: #{ffc_block_apply.1} parent=11 // pred_region
        _
      $region16: #{ffc_block_apply.1} parent=11 // pred_fallthru
        _
      // Predicated region
      $region17: #{ffc_block_apply.1} parent=11 // pred_check
        %p325 = pneg %p87
      $region18: #{ffc_block_apply.1} parent=11 // pred_check_branch
        %327 = sbr.rel (%p325) target = $region20
      $region19: #{ffc_block_apply.1} parent=11 // pred_region
        _
      $region20: #{ffc_block_apply.1} parent=11 // pred_fallthru
        _
      // Predicated region
      $region21: #{ffc_block_apply.1} parent=11 // pred_check
        %p328 = pneg %p108
      $region22: #{ffc_block_apply.1} parent=11 // pred_check_branch
        %330 = sbr.rel (%p328) target = $region24
      $region23: #{ffc_block_apply.1} parent=11 // pred_region
        _
      $region24: #{ffc_block_apply.1} parent=11 // pred_fallthru
        _
      // Predicated region
      $region25: #{ffc_block_apply.1} parent=11 // pred_check
        %p331 = pneg %p129
      $region26: #{ffc_block_apply.1} parent=11 // pred_check_branch
        %333 = sbr.rel (%p331) target = $region28
      $region27: #{ffc_block_apply.1} parent=11 // pred_region
        _
      $region28: #{ffc_block_apply.1} parent=11 // pred_fallthru
        _
      // Predicated region
      $region29: #{ffc_block_apply.1} parent=11 // pred_check
        %p334 = pneg %p150
      $region30: #{ffc_block_apply.1} parent=11 // pred_check_branch
        %336 = sbr.rel (%p334) target = $region32
      $region31: #{ffc_block_apply.1} parent=11 // pred_region
        _
      $region32: #{ffc_block_apply.1} parent=11 // pred_fallthru
        _
      // Predicated region
      $region33: #{ffc_block_apply.1} parent=11 // pred_check
        %p337 = pneg %p171
      $region34: #{ffc_block_apply.1} parent=11 // pred_check_branch
        %339 = sbr.rel (%p337) target = $region36
      $region35: #{ffc_block_apply.1} parent=11 // pred_region
        _
      $region36: #{ffc_block_apply.1} parent=11 // pred_fallthru
        _
      // Predicated region
      $region37: #{ffc_block_apply.1} parent=11 // pred_check
        %p340 = pneg %p192
      $region38: #{ffc_block_apply.1} parent=11 // pred_check_branch
        %342 = sbr.rel (%p340) target = $region40
      $region39: #{ffc_block_apply.1} parent=11 // pred_region
        _
      $region40: #{ffc_block_apply.1} parent=11 // pred_fallthru
        _
      // Predicated region
      $region41: #{ffc_block_apply.1} parent=11 // pred_check
        %p343 = pneg %p213
      $region42: #{ffc_block_apply.1} parent=11 // pred_check_branch
        %345 = sbr.rel (%p343) target = $region44
      $region43: #{ffc_block_apply.1} parent=11 // pred_region
        _
      $region44: #{ffc_block_apply.1} parent=11 // pred_fallthru
        _
      // Predicated region
      $region45: #{ffc_block_apply.1} parent=11 // pred_check
        %p346 = pneg %p234
      $region46: #{ffc_block_apply.1} parent=11 // pred_check_branch
        %348 = sbr.rel (%p346) target = $region48
      $region47: #{ffc_block_apply.1} parent=11 // pred_region
        _
      $region48: #{ffc_block_apply.1} parent=11 // pred_fallthru
        _
      // Predicated region
      $region49: #{ffc_block_apply.1} parent=11 // pred_check
        %p349 = pneg %p255
      $region50: #{ffc_block_apply.1} parent=11 // pred_check_branch
        %351 = sbr.rel (%p349) target = $region52
      $region51: #{ffc_block_apply.1} parent=11 // pred_region
        _
      $region52: #{ffc_block_apply.1} parent=11 // pred_fallthru
        _
    $region12: #{ffc_block_apply.1} parent=5 // pred_fallthru
      _
    %p352 = scmp.lt.s32.totalorder %s19, 2
    // Predicated region
    $region53: #{ffc_block_apply.1} parent=5 // pred_check
      %p353 = pneg %p352
    $region54: #{ffc_block_apply.1} parent=5 // pred_check_branch
      %355 = sbr.rel (%p353) target = $region56
    $region55: #{ffc_block_apply.1} parent=5 // pred_region
      // Predicated region
      $region57: #{ffc_block_apply.1} parent=55 // pred_check
        %p356 = pneg %p39
      $region58: #{ffc_block_apply.1} parent=55 // pred_check_branch
        %358 = sbr.rel (%p356) target = $region60
      $region59: #{ffc_block_apply.1} parent=55 // pred_region
        %p359 = scmp.lt.s32.totalorder %s19, 1
        %s360 = scalar_select %p359, %s19, 1
        %s361 = smul.addr %s360, 36
        %s362 = smul.addr %s361, 4
        %s363 = scalar_lea.vmem %s0, %s362
      $region60: #{ffc_block_apply.1} parent=55 // pred_fallthru
        _
    $region56: #{ffc_block_apply.1} parent=5 // pred_fallthru
      _
    %p364 = scmp.le.s32.totalorder 1, %s19
    %p365 = scmp.lt.s32.totalorder %s19, 3
    %p366 = pnand %p364, %p365
    %p367 = pneg %p366
    // Predicated region
    $region61: #{ffc_block_apply.1} parent=5 // pred_check
      _
    $region62: #{ffc_block_apply.1} parent=5 // pred_check_branch
      %369 = sbr.rel (%p366) target = $region64
    $region63: #{ffc_block_apply.1} parent=5 // pred_region
      %s370 = ssub.s32 %s19, 1
      %p371 = scmp.lt.s32.totalorder %s24, 1
      %s372 = scalar_select %p371, %s24, 1
      %s373 = smul.addr %s372, 36
      %s374 = smul.addr %s373, 4
      %s375 = scalar_lea.vmem %s0, %s374
      %p376 = pneg %p45
      %p377 = pneg %p42
      %p378 = pneg %p66
      %p379 = pneg %p63
      %p380 = pneg %p87
      %p381 = pneg %p84
      %p382 = pneg %p108
      %p383 = pneg %p105
      %p384 = pneg %p129
      %p385 = pneg %p126
      %p386 = pneg %p150
      %p387 = pneg %p147
      %p388 = pneg %p171
      %p389 = pneg %p168
      %p390 = pneg %p192
      %p391 = pneg %p189
      %p392 = pneg %p213
      %p393 = pneg %p210
      %p394 = pneg %p234
      %p395 = pneg %p231
      %p396 = pneg %p255
      %p397 = pneg %p252
      %p398 = pneg %p281
      %p399 = pneg %p278
      %p400 = scmp.lt.s32.totalorder %s24, 1
      %s401 = scalar_select %p400, %s24, 1
      %s402 = smul.addr %s401, 2
      %s403 = smul.addr %s402, 8
      %s404 = scalar_lea.vmem %s11, %s403
      %p405 = pneg %p307
      %p406 = pneg %p304
      %p407 = scmp.lt.s32.totalorder %s24, 1
      %s408 = scalar_select %p407, %s24, 1
      %s409 = smul.addr %s408, 2
      %s410 = smul.addr %s409, 8
      %s411 = scalar_lea.vmem %s12, %s410
      %p412 = scmp.lt.s32.totalorder %s24, 1
      %s413 = scalar_select %p412, %s24, 1
      %s414 = smul.addr %s413, 36
      %s415 = smul.addr %s414, 4
      %s416 = scalar_lea.vmem %s0, %s415
      %p417 = scmp.lt.s32.totalorder %s24, 1
      %s418 = scalar_select %p417, %s24, 1
      %s419 = smul.addr %s418, 2
      %s420 = smul.addr %s419, 8
      %s421 = scalar_lea.vmem %s11, %s420
      %p422 = scmp.lt.s32.totalorder %s24, 1
      %s423 = scalar_select %p422, %s24, 1
      %s424 = smul.addr %s423, 2
      %s425 = smul.addr %s424, 8
      %s426 = scalar_lea.vmem %s12, %s425
      %v428 = vld [vmem:[%s10] sm:$0xff]
      %v429 = vld [vmem:[%s10 + $0x8] sm:$0xff]
      %v430 = vld [vmem:[%s10 + $0x10] sm:$0xff]
      %v431 = vld [vmem:[%s10 + $0x18] sm:$0xff]
      %v432 = vld [vmem:[%s10 + $0x20] sm:$0xf]
      %v433 = vld [vmem:[%s416] sm:$0xff]
      %v434 = vld [vmem:[%s416 + $0x8] sm:$0xff]
      %v435 = vld [vmem:[%s416 + $0x10] sm:$0xff]
      %v436 = vld [vmem:[%s416 + $0x18] sm:$0xff]
      %v437 = vld [vmem:[%s416 + $0x20] sm:$0xff]
      %v438 = vld [vmem:[%s416 + $0x28] sm:$0xff]
      %v439 = vld [vmem:[%s416 + $0x30] sm:$0xff]
      %v440 = vld [vmem:[%s416 + $0x38] sm:$0xff]
      %v441 = vld [vmem:[%s416 + $0x40] sm:$0xff]
      %v442 = vld [vmem:[%s416 + $0x48] sm:$0xff]
      %v443 = vld [vmem:[%s416 + $0x50] sm:$0xff]
      %v444 = vld [vmem:[%s416 + $0x58] sm:$0xff]
      %v445 = vld [vmem:[%s416 + $0x60] sm:$0xff]
      %v446 = vld [vmem:[%s416 + $0x68] sm:$0xff]
      %v447 = vld [vmem:[%s416 + $0x70] sm:$0xff]
      %v448 = vld [vmem:[%s416 + $0x78] sm:$0xff]
      %v449 = vld [vmem:[%s416 + $0x80] sm:$0xff]
      %v450 = vld [vmem:[%s416 + $0x88] sm:$0xff]
      %v451 = vld [vmem:[%s1] sm:$0xff]
      %v452 = vld [vmem:[%s1 + $0x8] sm:$0xff]
      %v455 = vunpack.c.l.b16 %v451
      %v456 = vunpack.c.h.b16 %v451
      %v457 = vunpack.c.l.b16 %v452
      %v458 = vunpack.c.h.b16 %v452
      %v459 = vpack.c.b16 %v457, %v455
      %v460 = vpack.c.b16 %v458, %v456
      %v480 = vunpack.c.l.b16 %v433
      %v481 = vunpack.c.h.b16 %v433
      %v482 = vunpack.c.l.b16 %v434
      %v483 = vunpack.c.h.b16 %v434
      %v484 = vunpack.c.l.b16 %v435
      %v485 = vunpack.c.h.b16 %v435
      %v486 = vunpack.c.l.b16 %v436
      %v487 = vunpack.c.h.b16 %v436
      %v488 = vunpack.c.l.b16 %v437
      %v489 = vunpack.c.h.b16 %v437
      %v490 = vunpack.c.l.b16 %v438
      %v491 = vunpack.c.h.b16 %v438
      %v492 = vunpack.c.l.b16 %v439
      %v493 = vunpack.c.h.b16 %v439
      %v494 = vunpack.c.l.b16 %v440
      %v495 = vunpack.c.h.b16 %v440
      %v496 = vunpack.c.l.b16 %v441
      %v497 = vunpack.c.h.b16 %v441
      %v498 = vunpack.c.l.b16 %v442
      %v499 = vunpack.c.h.b16 %v442
      %v500 = vunpack.c.l.b16 %v443
      %v501 = vunpack.c.h.b16 %v443
      %v502 = vunpack.c.l.b16 %v444
      %v503 = vunpack.c.h.b16 %v444
      %v504 = vunpack.c.l.b16 %v445
      %v505 = vunpack.c.h.b16 %v445
      %v506 = vunpack.c.l.b16 %v446
      %v507 = vunpack.c.h.b16 %v446
      %v508 = vunpack.c.l.b16 %v447
      %v509 = vunpack.c.h.b16 %v447
      %v510 = vunpack.c.l.b16 %v448
      %v511 = vunpack.c.h.b16 %v448
      %v512 = vunpack.c.l.b16 %v449
      %v513 = vunpack.c.h.b16 %v449
      %v514 = vunpack.c.l.b16 %v450
      %v515 = vunpack.c.h.b16 %v450
      %v516 = vpack.c.b16 %v482, %v480
      %v517 = vpack.c.b16 %v483, %v481
      %v518 = vpack.c.b16 %v486, %v484
      %v519 = vpack.c.b16 %v487, %v485
      %v520 = vpack.c.b16 %v490, %v488
      %v521 = vpack.c.b16 %v491, %v489
      %v522 = vpack.c.b16 %v494, %v492
      %v523 = vpack.c.b16 %v495, %v493
      %v524 = vpack.c.b16 %v498, %v496
      %v525 = vpack.c.b16 %v499, %v497
      %v526 = vpack.c.b16 %v502, %v500
      %v527 = vpack.c.b16 %v503, %v501
      %v528 = vpack.c.b16 %v506, %v504
      %v529 = vpack.c.b16 %v507, %v505
      %v530 = vpack.c.b16 %v510, %v508
      %v531 = vpack.c.b16 %v511, %v509
      %v532 = vpack.c.b16 %v514, %v512
      %v533 = vpack.c.b16 %v515, %v513
      %vm552 = vcmask 130048
      %v554 = vsel %vm552, %v460, 0
      %556 = vmatprep.subr.bf16.mxu0 %v517
      %557 = vmatpush1.bf16.msra.mxu0 %v516
      %558 = vmatprep.subr.bf16.mxu0 %v519
      %559 = vmatpush1.bf16.msra.mxu0 %v518
      %560 = vmatprep.subr.bf16.mxu0 %v521
      %561 = vmatpush1.bf16.msra.mxu0 %v520
      %562 = vmatprep.subr.bf16.mxu0 %v523
      %563 = vmatpush1.bf16.msra.mxu0 %v522
      %564 = vmatprep.subr.bf16.mxu0 %v525
      %565 = vmatpush1.bf16.msra.mxu0 %v524
      %566 = vmatprep.subr.bf16.mxu0 %v527
      %567 = vmatpush1.bf16.msra.mxu0 %v526
      %568 = vmatprep.subr.bf16.mxu0 %v529
      %569 = vmatpush1.bf16.msra.mxu0 %v528
      %570 = vmatprep.subr.bf16.mxu0 %v531
      %571 = vmatpush1.bf16.msra.mxu0 %v530
      %572 = vmatprep.subr.bf16.mxu0 %v533
      %573 = vmatpush1.bf16.msra.mxu0 %v532
      %574 = vmatprep.subr.bf16.mxu0 0
      %575 = vmatpush1.bf16.msra.mxu0 0
      %576 = vmatprep.subr.bf16.mxu0 0
      %577 = vmatpush1.bf16.msra.mxu0 0
      %578 = vmatprep.subr.bf16.mxu0 0
      %579 = vmatpush1.bf16.msra.mxu0 0
      %580 = vmatprep.subr.bf16.mxu0 0
      %581 = vmatpush1.bf16.msra.mxu0 0
      %582 = vmatprep.subr.bf16.mxu0 0
      %583 = vmatpush1.bf16.msra.mxu0 0
      %584 = vmatprep.subr.bf16.mxu0 0
      %585 = vmatpush1.bf16.msra.mxu0 0
      %586 = vmatprep.subr.bf16.mxu0 0
      %587 = vmatpush1.bf16.msra.mxu0 0
      %588 = vmatprep.mubr.bf16.mxu0 %v554
      %589 = vmatmul.mubr.bf16.gmra.mrb[0].mxu0 %v459
      %v590 = vpop.f32.mrb[0].mxu0
      %v591 = vadd.f32 0.0, %v590
      %v592 = vpop.f32.mrb[0].mxu0
      %v593 = vadd.f32 0.0, %v592
      %v594 = vpop.f32.mrb[0].mxu0
      %v595 = vadd.f32 0.0, %v594
      %v596 = vpop.f32.mrb[0].mxu0
      %v597 = vadd.f32 0.0, %v596
      %598 = vdwg.mxu0
      %v599 = vld [vmem:[%s2] sm:$0x3]
      %v600 = vpack.c.b16 %v498, %v498
      %v601 = vpack.c.b16 %v499, %v499
      %vm602 = vcmask 64512
      %v604 = vsel %vm602, %v599, 0
      %vm606 = vcmask 1043456
      %v608 = vsel %vm606, %v600, 0
      %v611 = vsel %vm606, %v601, 0
      %613 = vmatprep.subr.bf16.mxu0 %v611
      %614 = vmatpush1.bf16.msra.mxu0 %v608
      %615 = vmatprep.subr.bf16.mxu0 0
      %616 = vmatpush1.bf16.msra.mxu0 0
      %617 = vmatprep.subr.bf16.mxu0 0
      %618 = vmatpush1.bf16.msra.mxu0 0
      %619 = vmatprep.subr.bf16.mxu0 0
      %620 = vmatpush1.bf16.msra.mxu0 0
      %621 = vmatprep.subr.bf16.mxu0 0
      %622 = vmatpush1.bf16.msra.mxu0 0
      %623 = vmatprep.subr.bf16.mxu0 0
      %624 = vmatpush1.bf16.msra.mxu0 0
      %625 = vmatprep.subr.bf16.mxu0 0
      %626 = vmatpush1.bf16.msra.mxu0 0
      %627 = vmatprep.subr.bf16.mxu0 0
      %628 = vmatpush1.bf16.msra.mxu0 0
      %629 = vmatprep.subr.bf16.mxu0 0
      %630 = vmatpush1.bf16.msra.mxu0 0
      %631 = vmatprep.subr.bf16.mxu0 0
      %632 = vmatpush1.bf16.msra.mxu0 0
      %633 = vmatprep.subr.bf16.mxu0 0
      %634 = vmatpush1.bf16.msra.mxu0 0
      %635 = vmatprep.subr.bf16.mxu0 0
      %636 = vmatpush1.bf16.msra.mxu0 0
      %637 = vmatprep.subr.bf16.mxu0 0
      %638 = vmatpush1.bf16.msra.mxu0 0
      %639 = vmatprep.subr.bf16.mxu0 0
      %640 = vmatpush1.bf16.msra.mxu0 0
      %641 = vmatprep.subr.bf16.mxu0 0
      %642 = vmatpush1.bf16.msra.mxu0 0
      %643 = vmatprep.subr.bf16.mxu0 0
      %644 = vmatpush1.bf16.msra.mxu0 0
      %645 = vmatprep.mubr.bf16.mxu0 0
      %646 = vmatmul.mubr.bf16.gmra.mrb[0].mxu0 %v604
      %v647 = vpop.f32.mrb[0].mxu0
      %v648 = vadd.f32 0.0, %v647
      %v649 = vpop.f32.mrb[0].mxu0
      %v650 = vadd.f32 0.0, %v649
      %v651 = vpop.f32.mrb[0].mxu0
      %v652 = vpop.f32.mrb[0].mxu0
      %653 = vdwg.mxu0
      %v654 = vsel %vm606, %v648, 0.0
      %v655 = vrot.slane %v654, 4
      %v656 = vadd.f32 %v654, %v655
      %v657 = vrot.slane %v656, 2
      %v658 = vadd.f32 %v656, %v657
      %v659 = vrot.slane %v658, 1
      %v660 = vadd.f32 %v658, %v659
      %v661 = vsel %vm606, %v650, 0.0
      %v662 = vrot.slane %v661, 4
      %v663 = vadd.f32 %v661, %v662
      %v664 = vrot.slane %v663, 2
      %v665 = vadd.f32 %v663, %v664
      %v666 = vrot.slane %v665, 1
      %v667 = vadd.f32 %v665, %v666
      %v668 = vrcp.pop 4.0
      %v669 = vmul.f32 %v660, %v668
      %v670 = vmul.f32 %v667, %v668
      %v671 = vsub.f32 %v648, %v669
      %v672 = vsub.f32 %v650, %v670
      %v673 = vmul.f32 %v671, %v671
      %v674 = vmul.f32 %v672, %v672
      %v675 = vsel %vm606, %v673, 0.0
      %v676 = vrot.slane %v675, 4
      %v677 = vadd.f32 %v675, %v676
      %v678 = vrot.slane %v677, 2
      %v679 = vadd.f32 %v677, %v678
      %v680 = vrot.slane %v679, 1
      %v681 = vadd.f32 %v679, %v680
      %v682 = vsel %vm606, %v674, 0.0
      %v683 = vrot.slane %v682, 4
      %v684 = vadd.f32 %v682, %v683
      %v685 = vrot.slane %v684, 2
      %v686 = vadd.f32 %v684, %v685
      %v687 = vrot.slane %v686, 1
      %v688 = vadd.f32 %v686, %v687
      %v689 = vmul.f32 %v681, %v668
      %v690 = vmul.f32 %v688, %v668
      %v691 = vadd.f32 %v689, 1e-05
      %v692 = vadd.f32 %v690, 1e-05
      %v693 = vrsqrt.pop %v691
      %v694 = vrsqrt.pop %v692
      %v695 = vmul.f32 %v671, %v693
      %v696 = vmul.f32 %v672, %v694
      %698 = vset.pattern.permute.xlu0 0
      %699 = vperm.xlu0 %698, %v428
      %v700 = vpop.permute.xlu0 %699
      %v702 = vmul.f32 %v695, %v700
      %v703 = vmul.f32 %v696, %v700
      %704 = vset.pattern.permute.xlu0 1
      %705 = vperm.xlu0 %704, %v428
      %v706 = vpop.permute.xlu0 %705
      %v708 = vadd.f32 %v702, %v706
      %v709 = vadd.f32 %v703, %v706
      %v710 = vmin.f32 %v708, 20.0
      %v711 = vmin.f32 %v709, 20.0
      %v712 = vmul.f32 %v710, 1.442695
      %v713 = vpow.pop %v712
      %v714 = vmul.f32 %v711, 1.442695
      %v715 = vpow.pop %v714
      %v716 = vadd.f32 %v713, 2.0
      %v717 = vadd.f32 %v715, 2.0
      %v718 = vmul.f32 %v713, %v716
      %v719 = vmul.f32 %v715, %v717
      %v720 = vmul.f32 %v708, %v718
      %v721 = vmul.f32 %v709, %v719
      %v722 = vadd.f32 %v718, 2.0
      %v723 = vadd.f32 %v719, 2.0
      %v724 = vrcp.pop %v722
      %v725 = vmul.f32 %v720, %v724
      %v726 = vrcp.pop %v723
      %v727 = vmul.f32 %v721, %v726
      %v728 = vpack.c.bf16 %v725, %v725
      %v729 = vpack.c.bf16 %v727, %v727
      %v730 = vld [vmem:[%s3] sm:$0xff]
      %v731 = vld [vmem:[%s3 + $0x8] sm:$0xf]
      %v732 = vld [vmem:[%s3 + $0xc] sm:$0xff]
      %v733 = vld [vmem:[%s3 + $0x14] sm:$0xf]
      %v734 = vld [vmem:[%s3 + $0x18] sm:$0xff]
      %v735 = vld [vmem:[%s3 + $0x20] sm:$0xf]
      %v736 = vld [vmem:[%s3 + $0x24] sm:$0xff]
      %v737 = vld [vmem:[%s3 + $0x2c] sm:$0xf]
      %v738 = vld [vmem:[%s3 + $0x30] sm:$0xff]
      %v739 = vld [vmem:[%s3 + $0x38] sm:$0xf]
      %v740 = vld [vmem:[%s3 + $0x3c] sm:$0xff]
      %v741 = vld [vmem:[%s3 + $0x44] sm:$0xf]
      %v742 = vld [vmem:[%s3 + $0x48] sm:$0xff]
      %v743 = vld [vmem:[%s3 + $0x50] sm:$0xf]
      %v744 = vld [vmem:[%s3 + $0x54] sm:$0xff]
      %v745 = vld [vmem:[%s3 + $0x5c] sm:$0xf]
      %v746 = vld [vmem:[%s3 + $0x60] sm:$0xff]
      %v747 = vld [vmem:[%s3 + $0x68] sm:$0xf]
      %v748 = vld [vmem:[%s3 + $0x6c] sm:$0xff]
      %v749 = vld [vmem:[%s3 + $0x74] sm:$0xf]
      %v750 = vld [vmem:[%s3 + $0x78] sm:$0xff]
      %v751 = vld [vmem:[%s3 + $0x80] sm:$0xf]
      %v752 = vld [vmem:[%s3 + $0x84] sm:$0xff]
      %v753 = vld [vmem:[%s3 + $0x8c] sm:$0xf]
      %v754 = vld [vmem:[%s3 + $0x90] sm:$0xff]
      %v755 = vld [vmem:[%s3 + $0x98] sm:$0xf]
      %v756 = vld [vmem:[%s3 + $0x9c] sm:$0xff]
      %v757 = vld [vmem:[%s3 + $0xa4] sm:$0xf]
      %v758 = vld [vmem:[%s3 + $0xa8] sm:$0xff]
      %v759 = vld [vmem:[%s3 + $0xb0] sm:$0xf]
      %v760 = vld [vmem:[%s3 + $0xb4] sm:$0xff]
      %v761 = vld [vmem:[%s3 + $0xbc] sm:$0xf]
      %v762 = vld [vmem:[%s3 + $0xc0] sm:$0xff]
      %v763 = vld [vmem:[%s3 + $0xc8] sm:$0xf]
      %v764 = vld [vmem:[%s3 + $0xcc] sm:$0xff]
      %v765 = vld [vmem:[%s3 + $0xd4] sm:$0xf]
      %v766 = vld [vmem:[%s3 + $0xd8] sm:$0xff]
      %v767 = vld [vmem:[%s3 + $0xe0] sm:$0xf]
      %v768 = vld [vmem:[%s3 + $0xe4] sm:$0xff]
      %v769 = vld [vmem:[%s3 + $0xec] sm:$0xf]
      %v770 = vld [vmem:[%s3 + $0xf0] sm:$0xff]
      %v771 = vld [vmem:[%s3 + $0xf8] sm:$0xf]
      %v772 = vld [vmem:[%s3 + $0xfc] sm:$0xff]
      %v773 = vld [vmem:[%s3 + $0x104] sm:$0xf]
      %v774 = vld [vmem:[%s3 + $0x108] sm:$0xff]
      %v775 = vld [vmem:[%s3 + $0x110] sm:$0xf]
      %v776 = vld [vmem:[%s3 + $0x114] sm:$0xff]
      %v777 = vld [vmem:[%s3 + $0x11c] sm:$0xf]
      %v778 = vld [vmem:[%s3 + $0x120] sm:$0xff]
      %v779 = vld [vmem:[%s3 + $0x128] sm:$0xf]
      %v780 = vld [vmem:[%s3 + $0x12c] sm:$0xff]
      %v781 = vld [vmem:[%s3 + $0x134] sm:$0xf]
      %v782 = vld [vmem:[%s3 + $0x138] sm:$0xff]
      %v783 = vld [vmem:[%s3 + $0x140] sm:$0xf]
      %v784 = vld [vmem:[%s3 + $0x144] sm:$0xff]
      %v785 = vld [vmem:[%s3 + $0x14c] sm:$0xf]
      %v786 = vld [vmem:[%s3 + $0x150] sm:$0xff]
      %v787 = vld [vmem:[%s3 + $0x158] sm:$0xf]
      %v788 = vld [vmem:[%s3 + $0x15c] sm:$0xff]
      %v789 = vld [vmem:[%s3 + $0x164] sm:$0xf]
      %v790 = vld [vmem:[%s3 + $0x168] sm:$0xff]
      %v791 = vld [vmem:[%s3 + $0x170] sm:$0xf]
      %v792 = vld [vmem:[%s3 + $0x174] sm:$0xff]
      %v793 = vld [vmem:[%s3 + $0x17c] sm:$0xf]
      %v858 = vunpack.c.l.b16 %v730
      %v859 = vunpack.c.h.b16 %v730
      %v860 = vunpack.c.l.b16 %v731
      %v861 = vunpack.c.l.b16 %v732
      %v862 = vunpack.c.h.b16 %v732
      %v863 = vunpack.c.l.b16 %v733
      %v864 = vunpack.c.l.b16 %v734
      %v865 = vunpack.c.h.b16 %v734
      %v866 = vunpack.c.l.b16 %v735
      %v867 = vunpack.c.l.b16 %v736
      %v868 = vunpack.c.h.b16 %v736
      %v869 = vunpack.c.l.b16 %v737
      %v870 = vunpack.c.l.b16 %v738
      %v871 = vunpack.c.h.b16 %v738
      %v872 = vunpack.c.l.b16 %v739
      %v873 = vunpack.c.l.b16 %v740
      %v874 = vunpack.c.h.b16 %v740
      %v875 = vunpack.c.l.b16 %v741
      %v876 = vunpack.c.l.b16 %v742
      %v877 = vunpack.c.h.b16 %v742
      %v878 = vunpack.c.l.b16 %v743
      %v879 = vunpack.c.l.b16 %v744
      %v880 = vunpack.c.h.b16 %v744
      %v881 = vunpack.c.l.b16 %v745
      %v882 = vunpack.c.l.b16 %v746
      %v883 = vunpack.c.h.b16 %v746
      %v884 = vunpack.c.l.b16 %v747
      %v885 = vunpack.c.l.b16 %v748
      %v886 = vunpack.c.h.b16 %v748
      %v887 = vunpack.c.l.b16 %v749
      %v888 = vunpack.c.l.b16 %v750
      %v889 = vunpack.c.h.b16 %v750
      %v890 = vunpack.c.l.b16 %v751
      %v891 = vunpack.c.l.b16 %v752
      %v892 = vunpack.c.h.b16 %v752
      %v893 = vunpack.c.l.b16 %v753
      %v894 = vunpack.c.l.b16 %v754
      %v895 = vunpack.c.h.b16 %v754
      %v896 = vunpack.c.l.b16 %v755
      %v897 = vunpack.c.l.b16 %v756
      %v898 = vunpack.c.h.b16 %v756
      %v899 = vunpack.c.l.b16 %v757
      %v900 = vunpack.c.l.b16 %v758
      %v901 = vunpack.c.h.b16 %v758
      %v902 = vunpack.c.l.b16 %v759
      %v903 = vunpack.c.l.b16 %v760
      %v904 = vunpack.c.h.b16 %v760
      %v905 = vunpack.c.l.b16 %v761
      %v906 = vunpack.c.l.b16 %v762
      %v907 = vunpack.c.h.b16 %v762
      %v908 = vunpack.c.l.b16 %v763
      %v909 = vunpack.c.l.b16 %v764
      %v910 = vunpack.c.h.b16 %v764
      %v911 = vunpack.c.l.b16 %v765
      %v912 = vunpack.c.l.b16 %v766
      %v913 = vunpack.c.h.b16 %v766
      %v914 = vunpack.c.l.b16 %v767
      %v915 = vunpack.c.l.b16 %v768
      %v916 = vunpack.c.h.b16 %v768
      %v917 = vunpack.c.l.b16 %v769
      %v918 = vunpack.c.l.b16 %v770
      %v919 = vunpack.c.h.b16 %v770
      %v920 = vunpack.c.l.b16 %v771
      %v921 = vunpack.c.l.b16 %v772
      %v922 = vunpack.c.h.b16 %v772
      %v923 = vunpack.c.l.b16 %v773
      %v924 = vunpack.c.l.b16 %v774
      %v925 = vunpack.c.h.b16 %v774
      %v926 = vunpack.c.l.b16 %v775
      %v927 = vunpack.c.l.b16 %v776
      %v928 = vunpack.c.h.b16 %v776
      %v929 = vunpack.c.l.b16 %v777
      %v930 = vunpack.c.l.b16 %v778
      %v931 = vunpack.c.h.b16 %v778
      %v932 = vunpack.c.l.b16 %v779
      %v933 = vunpack.c.l.b16 %v780
      %v934 = vunpack.c.h.b16 %v780
      %v935 = vunpack.c.l.b16 %v781
      %v936 = vunpack.c.l.b16 %v782
      %v937 = vunpack.c.h.b16 %v782
      %v938 = vunpack.c.l.b16 %v783
      %v939 = vunpack.c.l.b16 %v784
      %v940 = vunpack.c.h.b16 %v784
      %v941 = vunpack.c.l.b16 %v785
      %v942 = vunpack.c.l.b16 %v786
      %v943 = vunpack.c.h.b16 %v786
      %v944 = vunpack.c.l.b16 %v787
      %v945 = vunpack.c.l.b16 %v788
      %v946 = vunpack.c.h.b16 %v788
      %v947 = vunpack.c.l.b16 %v789
      %v948 = vunpack.c.l.b16 %v790
      %v949 = vunpack.c.h.b16 %v790
      %v950 = vunpack.c.l.b16 %v791
      %v951 = vunpack.c.l.b16 %v792
      %v952 = vunpack.c.h.b16 %v792
      %v953 = vunpack.c.l.b16 %v793
      %v954 = vpack.c.b16 %v861, %v858
      %v955 = vpack.c.b16 %v862, %v859
      %v956 = vpack.c.b16 %v863, %v860
      %v957 = vpack.c.b16 %v867, %v864
      %v958 = vpack.c.b16 %v868, %v865
      %v959 = vpack.c.b16 %v869, %v866
      %v960 = vpack.c.b16 %v873, %v870
      %v961 = vpack.c.b16 %v874, %v871
      %v962 = vpack.c.b16 %v875, %v872
      %v963 = vpack.c.b16 %v879, %v876
      %v964 = vpack.c.b16 %v880, %v877
      %v965 = vpack.c.b16 %v881, %v878
      %v966 = vpack.c.b16 %v885, %v882
      %v967 = vpack.c.b16 %v886, %v883
      %v968 = vpack.c.b16 %v887, %v884
      %v969 = vpack.c.b16 %v891, %v888
      %v970 = vpack.c.b16 %v892, %v889
      %v971 = vpack.c.b16 %v893, %v890
      %v972 = vpack.c.b16 %v897, %v894
      %v973 = vpack.c.b16 %v898, %v895
      %v974 = vpack.c.b16 %v899, %v896
      %v975 = vpack.c.b16 %v903, %v900
      %v976 = vpack.c.b16 %v904, %v901
      %v977 = vpack.c.b16 %v905, %v902
      %v978 = vpack.c.b16 %v909, %v906
      %v979 = vpack.c.b16 %v910, %v907
      %v980 = vpack.c.b16 %v911, %v908
      %v981 = vpack.c.b16 %v915, %v912
      %v982 = vpack.c.b16 %v916, %v913
      %v983 = vpack.c.b16 %v917, %v914
      %v984 = vpack.c.b16 %v921, %v918
      %v985 = vpack.c.b16 %v922, %v919
      %v986 = vpack.c.b16 %v923, %v920
      %v987 = vpack.c.b16 %v927, %v924
      %v988 = vpack.c.b16 %v928, %v925
      %v989 = vpack.c.b16 %v929, %v926
      %v990 = vpack.c.b16 %v933, %v930
      %v991 = vpack.c.b16 %v934, %v931
      %v992 = vpack.c.b16 %v935, %v932
      %v993 = vpack.c.b16 %v939, %v936
      %v994 = vpack.c.b16 %v940, %v937
      %v995 = vpack.c.b16 %v941, %v938
      %v996 = vpack.c.b16 %v945, %v942
      %v997 = vpack.c.b16 %v946, %v943
      %v998 = vpack.c.b16 %v947, %v944
      %v999 = vpack.c.b16 %v951, %v948
      %v1000 = vpack.c.b16 %v952, %v949
      %v1001 = vpack.c.b16 %v953, %v950
      %1050 = vmatprep.subr.bf16.mxu0 %v955
      %1051 = vmatpush1.bf16.msra.mxu0 %v954
      %1052 = vmatprep.subr.bf16.mxu0 %v958
      %1053 = vmatpush1.bf16.msra.mxu0 %v957
      %1054 = vmatprep.subr.bf16.mxu0 %v961
      %1055 = vmatpush1.bf16.msra.mxu0 %v960
      %1056 = vmatprep.subr.bf16.mxu0 %v964
      %1057 = vmatpush1.bf16.msra.mxu0 %v963
      %1058 = vmatprep.subr.bf16.mxu0 %v967
      %1059 = vmatpush1.bf16.msra.mxu0 %v966
      %1060 = vmatprep.subr.bf16.mxu0 %v970
      %1061 = vmatpush1.bf16.msra.mxu0 %v969
      %1062 = vmatprep.subr.bf16.mxu0 %v973
      %1063 = vmatpush1.bf16.msra.mxu0 %v972
      %1064 = vmatprep.subr.bf16.mxu0 %v976
      %1065 = vmatpush1.bf16.msra.mxu0 %v975
      %1066 = vmatprep.subr.bf16.mxu0 %v979
      %1067 = vmatpush1.bf16.msra.mxu0 %v978
      %1068 = vmatprep.subr.bf16.mxu0 %v982
      %1069 = vmatpush1.bf16.msra.mxu0 %v981
      %1070 = vmatprep.subr.bf16.mxu0 %v985
      %1071 = vmatpush1.bf16.msra.mxu0 %v984
      %1072 = vmatprep.subr.bf16.mxu0 %v988
      %1073 = vmatpush1.bf16.msra.mxu0 %v987
      %1074 = vmatprep.subr.bf16.mxu0 %v991
      %1075 = vmatpush1.bf16.msra.mxu0 %v990
      %1076 = vmatprep.subr.bf16.mxu0 %v994
      %1077 = vmatpush1.bf16.msra.mxu0 %v993
      %1078 = vmatprep.subr.bf16.mxu0 %v997
      %1079 = vmatpush1.bf16.msra.mxu0 %v996
      %1080 = vmatprep.subr.bf16.mxu0 %v1000
      %1081 = vmatpush1.bf16.msra.mxu0 %v999
      %1082 = vmatprep.mubr.bf16.mxu0 %v729
      %1083 = vmatmul.mubr.bf16.gmra.mrb[0].mxu0 %v728
      %v1084 = vpop.f32.mrb[0].mxu0
      %v1085 = vadd.f32 0.0, %v1084
      %v1086 = vpop.f32.mrb[0].mxu0
      %v1087 = vadd.f32 0.0, %v1086
      %v1088 = vpop.f32.mrb[0].mxu0
      %v1089 = vpop.f32.mrb[0].mxu0
      %1090 = vdwg.mxu0
      %1091 = vmatprep.subr.bf16.mxu0 0
      %1092 = vmatpush1.bf16.msra.mxu0 %v956
      %1093 = vmatprep.subr.bf16.mxu0 0
      %1094 = vmatpush1.bf16.msra.mxu0 %v959
      %1095 = vmatprep.subr.bf16.mxu0 0
      %1096 = vmatpush1.bf16.msra.mxu0 %v962
      %1097 = vmatprep.subr.bf16.mxu0 0
      %1098 = vmatpush1.bf16.msra.mxu0 %v965
      %1099 = vmatprep.subr.bf16.mxu0 0
      %1100 = vmatpush1.bf16.msra.mxu0 %v968
      %1101 = vmatprep.subr.bf16.mxu0 0
      %1102 = vmatpush1.bf16.msra.mxu0 %v971
      %1103 = vmatprep.subr.bf16.mxu0 0
      %1104 = vmatpush1.bf16.msra.mxu0 %v974
      %1105 = vmatprep.subr.bf16.mxu0 0
      %1106 = vmatpush1.bf16.msra.mxu0 %v977
      %1107 = vmatprep.subr.bf16.mxu0 0
      %1108 = vmatpush1.bf16.msra.mxu0 %v980
      %1109 = vmatprep.subr.bf16.mxu0 0
      %1110 = vmatpush1.bf16.msra.mxu0 %v983
      %1111 = vmatprep.subr.bf16.mxu0 0
      %1112 = vmatpush1.bf16.msra.mxu0 %v986
      %1113 = vmatprep.subr.bf16.mxu0 0
      %1114 = vmatpush1.bf16.msra.mxu0 %v989
      %1115 = vmatprep.subr.bf16.mxu0 0
      %1116 = vmatpush1.bf16.msra.mxu0 %v992
      %1117 = vmatprep.subr.bf16.mxu0 0
      %1118 = vmatpush1.bf16.msra.mxu0 %v995
      %1119 = vmatprep.subr.bf16.mxu0 0
      %1120 = vmatpush1.bf16.msra.mxu0 %v998
      %1121 = vmatprep.subr.bf16.mxu0 0
      %1122 = vmatpush1.bf16.msra.mxu0 %v1001
      %1123 = vmatprep.mubr.bf16.mxu0 %v729
      %1124 = vmatmul.mubr.bf16.gmra.mrb[0].mxu0 %v728
      %v1125 = vpop.f32.mrb[0].mxu0
      %v1126 = vadd.f32 0.0, %v1125
      %v1127 = vpop.f32.mrb[0].mxu0
      %v1128 = vpop.f32.mrb[0].mxu0
      %v1129 = vpop.f32.mrb[0].mxu0
      %1130 = vdwg.mxu0
      %v1133 = vrot.slane %v1087, 4
      %v1134 = vrot.slane %v1126, 4
      %1135 = vrot.lane.b32.xlu0 %v1133, 112
      %v1136 = vpop.permute.xlu0 %1135
      %1137 = vrot.lane.b32.xlu0 %v1134, 112
      %v1138 = vpop.permute.xlu0 %1137
      %vm1139 = vcmask 916480
      %v1140 = vsel %vm1139, %v1136, %v1138
      %v1143 = vsel %vm606, %v1085, %v1140
      %v1144 = vsel %vm606, %v1087, %v1138
      %v1145 = vld [vmem:[%s4] sm:$0xf]
      %v1146 = vpack.c.bf16 %v1143, %v1143
      %v1147 = vpack.c.bf16 %v1144, %v1144
      %v1149 = vsel %vm602, %v1145, 0
      %v1152 = vsel %vm606, %v1146, 0
      %v1155 = vsel %vm606, %v1147, 0
      %1157 = vmatprep.subr.bf16.mxu0 %v1155
      %1158 = vmatpush1.bf16.msra.mxu0 %v1152
      %1159 = vmatprep.subr.bf16.mxu0 0
      %1160 = vmatpush1.bf16.msra.mxu0 0
      %1161 = vmatprep.subr.bf16.mxu0 0
      %1162 = vmatpush1.bf16.msra.mxu0 0
      %1163 = vmatprep.subr.bf16.mxu0 0
      %1164 = vmatpush1.bf16.msra.mxu0 0
      %1165 = vmatprep.subr.bf16.mxu0 0
      %1166 = vmatpush1.bf16.msra.mxu0 0
      %1167 = vmatprep.subr.bf16.mxu0 0
      %1168 = vmatpush1.bf16.msra.mxu0 0
      %1169 = vmatprep.subr.bf16.mxu0 0
      %1170 = vmatpush1.bf16.msra.mxu0 0
      %1171 = vmatprep.subr.bf16.mxu0 0
      %1172 = vmatpush1.bf16.msra.mxu0 0
      %1173 = vmatprep.subr.bf16.mxu0 0
      %1174 = vmatpush1.bf16.msra.mxu0 0
      %1175 = vmatprep.subr.bf16.mxu0 0
      %1176 = vmatpush1.bf16.msra.mxu0 0
      %1177 = vmatprep.subr.bf16.mxu0 0
      %1178 = vmatpush1.bf16.msra.mxu0 0
      %1179 = vmatprep.subr.bf16.mxu0 0
      %1180 = vmatpush1.bf16.msra.mxu0 0
      %1181 = vmatprep.subr.bf16.mxu0 0
      %1182 = vmatpush1.bf16.msra.mxu0 0
      %1183 = vmatprep.subr.bf16.mxu0 0
      %1184 = vmatpush1.bf16.msra.mxu0 0
      %1185 = vmatprep.subr.bf16.mxu0 0
      %1186 = vmatpush1.bf16.msra.mxu0 0
      %1187 = vmatprep.subr.bf16.mxu0 0
      %1188 = vmatpush1.bf16.msra.mxu0 0
      %1189 = vmatprep.mubr.bf16.mxu0 0
      %1190 = vmatmul.mubr.bf16.gmra.mrb[0].mxu0 %v1149
      %v1191 = vpop.f32.mrb[0].mxu0
      %v1192 = vadd.f32 0.0, %v1191
      %v1193 = vpop.f32.mrb[0].mxu0
      %v1194 = vadd.f32 0.0, %v1193
      %v1195 = vpop.f32.mrb[0].mxu0
      %v1196 = vpop.f32.mrb[0].mxu0
      %1197 = vdwg.mxu0
      %v1198 = vrot.slane %v1192, 4
      %v1199 = vadd.f32 %v1192, %v1198
      %v1200 = vrot.slane %v1199, 2
      %v1201 = vadd.f32 %v1199, %v1200
      %v1202 = vrot.slane %v1201, 1
      %v1203 = vadd.f32 %v1201, %v1202
      %v1204 = vsel %vm552, %v1194, 0.0
      %v1205 = vrot.slane %v1204, 4
      %v1206 = vadd.f32 %v1204, %v1205
      %v1207 = vrot.slane %v1206, 2
      %v1208 = vadd.f32 %v1206, %v1207
      %v1209 = vrot.slane %v1208, 1
      %v1210 = vadd.f32 %v1208, %v1209
      %v1211 = vrcp.pop 8.0
      %v1212 = vmul.f32 %v1203, %v1211
      %v1213 = vmul.f32 %v1210, %v1211
      %v1214 = vsub.f32 %v1192, %v1212
      %v1215 = vsub.f32 %v1194, %v1213
      %v1216 = vmul.f32 %v1214, %v1214
      %v1217 = vmul.f32 %v1215, %v1215
      %v1218 = vrot.slane %v1216, 4
      %v1219 = vadd.f32 %v1216, %v1218
      %v1220 = vrot.slane %v1219, 2
      %v1221 = vadd.f32 %v1219, %v1220
      %v1222 = vrot.slane %v1221, 1
      %v1223 = vadd.f32 %v1221, %v1222
      %v1224 = vsel %vm552, %v1217, 0.0
      %v1225 = vrot.slane %v1224, 4
      %v1226 = vadd.f32 %v1224, %v1225
      %v1227 = vrot.slane %v1226, 2
      %v1228 = vadd.f32 %v1226, %v1227
      %v1229 = vrot.slane %v1228, 1
      %v1230 = vadd.f32 %v1228, %v1229
      %v1231 = vmul.f32 %v1223, %v1211
      %v1232 = vmul.f32 %v1230, %v1211
      %v1233 = vadd.f32 %v1231, 1e-05
      %v1234 = vadd.f32 %v1232, 1e-05
      %v1235 = vrsqrt.pop %v1233
      %v1236 = vrsqrt.pop %v1234
      %v1237 = vmul.f32 %v1214, %v1235
      %v1238 = vmul.f32 %v1215, %v1236
      %1240 = vset.pattern.permute.xlu0 0
      %1241 = vperm.xlu0 %1240, %v429
      %v1242 = vpop.permute.xlu0 %1241
      %v1243 = vrot.slane %v700, 4
      %v1244 = vrot.slane %v1242, 4
      %v1245 = vsel %vm606, %v1243, %v1244
      %v1247 = vmul.f32 %v1237, %v1245
      %v1248 = vmul.f32 %v1238, %v1245
      %1249 = vset.pattern.permute.xlu0 1
      %1250 = vperm.xlu0 %1249, %v429
      %v1251 = vpop.permute.xlu0 %1250
      %v1252 = vrot.slane %v706, 4
      %v1253 = vrot.slane %v1251, 4
      %v1254 = vsel %vm606, %v1252, %v1253
      %v1256 = vadd.f32 %v1247, %v1254
      %v1257 = vadd.f32 %v1248, %v1254
      %v1258 = vmax.f32 %v1256, 0.0
      %v1259 = vmax.f32 %v1257, 0.0
      %v1262 = vrot.slane %v1258, 4
      %v1263 = vrot.slane %v1259, 4
      %1264 = vrot.lane.b32.xlu0 %v1262, 16
      %v1265 = vpop.permute.xlu0 %1264
      %1266 = vrot.lane.b32.xlu0 %v1263, 16
      %v1267 = vpop.permute.xlu0 %1266
      %v1268 = vsel %vm552, %v1265, %v1267
      %v1271 = vsel %vm552, %v1259, %v1265
      %v1272 = vpack.c.bf16 %v1258, %v1258
      %v1273 = vpack.c.bf16 %v1271, %v1271
      %v1274 = vpack.c.bf16 %v1268, %v1268
      %v1275 = vld [vmem:[%s5] sm:$0xff]
      %v1276 = vld [vmem:[%s5 + $0x8] sm:$0xff]
      %v1277 = vld [vmem:[%s5 + $0x10] sm:$0xff]
      %v1278 = vld [vmem:[%s5 + $0x18] sm:$0xff]
      %v1279 = vld [vmem:[%s5 + $0x20] sm:$0xff]
      %v1280 = vld [vmem:[%s5 + $0x28] sm:$0xff]
      %v1281 = vld [vmem:[%s5 + $0x30] sm:$0xff]
      %v1282 = vld [vmem:[%s5 + $0x38] sm:$0xff]
      %v1283 = vld [vmem:[%s5 + $0x40] sm:$0xff]
      %v1284 = vld [vmem:[%s5 + $0x48] sm:$0xff]
      %v1285 = vld [vmem:[%s5 + $0x50] sm:$0xff]
      %v1286 = vld [vmem:[%s5 + $0x58] sm:$0xff]
      %v1287 = vld [vmem:[%s5 + $0x60] sm:$0xff]
      %v1288 = vld [vmem:[%s5 + $0x68] sm:$0xff]
      %v1289 = vld [vmem:[%s5 + $0x70] sm:$0xff]
      %v1290 = vld [vmem:[%s5 + $0x78] sm:$0xff]
      %v1291 = vld [vmem:[%s5 + $0x80] sm:$0xff]
      %v1292 = vld [vmem:[%s5 + $0x88] sm:$0xff]
      %v1293 = vld [vmem:[%s5 + $0x90] sm:$0xff]
      %v1294 = vld [vmem:[%s5 + $0x98] sm:$0xff]
      %v1295 = vld [vmem:[%s5 + $0xa0] sm:$0xff]
      %v1296 = vld [vmem:[%s5 + $0xa8] sm:$0xff]
      %v1297 = vld [vmem:[%s5 + $0xb0] sm:$0xff]
      %v1298 = vld [vmem:[%s5 + $0xb8] sm:$0xff]
      %v1299 = vld [vmem:[%s5 + $0xc0] sm:$0xff]
      %v1300 = vld [vmem:[%s5 + $0xc8] sm:$0xff]
      %v1301 = vld [vmem:[%s5 + $0xd0] sm:$0xff]
      %v1302 = vld [vmem:[%s5 + $0xd8] sm:$0xff]
      %v1303 = vld [vmem:[%s5 + $0xe0] sm:$0xff]
      %v1304 = vld [vmem:[%s5 + $0xe8] sm:$0xff]
      %v1305 = vld [vmem:[%s5 + $0xf0] sm:$0xff]
      %v1306 = vld [vmem:[%s5 + $0xf8] sm:$0xff]
      %v1307 = vld [vmem:[%s5 + $0x100] sm:$0xff]
      %v1308 = vld [vmem:[%s5 + $0x108] sm:$0xff]
      %v1309 = vld [vmem:[%s5 + $0x110] sm:$0xff]
      %v1310 = vld [vmem:[%s5 + $0x118] sm:$0xff]
      %v1347 = vunpack.c.l.b16 %v1275
      %v1348 = vunpack.c.h.b16 %v1275
      %v1349 = vunpack.c.l.b16 %v1276
      %v1350 = vunpack.c.h.b16 %v1276
      %v1351 = vunpack.c.l.b16 %v1277
      %v1352 = vunpack.c.h.b16 %v1277
      %v1353 = vunpack.c.l.b16 %v1278
      %v1354 = vunpack.c.h.b16 %v1278
      %v1355 = vunpack.c.l.b16 %v1279
      %v1356 = vunpack.c.h.b16 %v1279
      %v1357 = vunpack.c.l.b16 %v1280
      %v1358 = vunpack.c.h.b16 %v1280
      %v1359 = vunpack.c.l.b16 %v1281
      %v1360 = vunpack.c.h.b16 %v1281
      %v1361 = vunpack.c.l.b16 %v1282
      %v1362 = vunpack.c.h.b16 %v1282
      %v1363 = vunpack.c.l.b16 %v1283
      %v1364 = vunpack.c.h.b16 %v1283
      %v1365 = vunpack.c.l.b16 %v1284
      %v1366 = vunpack.c.h.b16 %v1284
      %v1367 = vunpack.c.l.b16 %v1285
      %v1368 = vunpack.c.h.b16 %v1285
      %v1369 = vunpack.c.l.b16 %v1286
      %v1370 = vunpack.c.h.b16 %v1286
      %v1371 = vunpack.c.l.b16 %v1287
      %v1372 = vunpack.c.h.b16 %v1287
      %v1373 = vunpack.c.l.b16 %v1288
      %v1374 = vunpack.c.h.b16 %v1288
      %v1375 = vunpack.c.l.b16 %v1289
      %v1376 = vunpack.c.h.b16 %v1289
      %v1377 = vunpack.c.l.b16 %v1290
      %v1378 = vunpack.c.h.b16 %v1290
      %v1379 = vunpack.c.l.b16 %v1291
      %v1380 = vunpack.c.h.b16 %v1291
      %v1381 = vunpack.c.l.b16 %v1292
      %v1382 = vunpack.c.h.b16 %v1292
      %v1383 = vunpack.c.l.b16 %v1293
      %v1384 = vunpack.c.h.b16 %v1293
      %v1385 = vunpack.c.l.b16 %v1294
      %v1386 = vunpack.c.h.b16 %v1294
      %v1387 = vunpack.c.l.b16 %v1295
      %v1388 = vunpack.c.h.b16 %v1295
      %v1389 = vunpack.c.l.b16 %v1296
      %v1390 = vunpack.c.h.b16 %v1296
      %v1391 = vunpack.c.l.b16 %v1297
      %v1392 = vunpack.c.h.b16 %v1297
      %v1393 = vunpack.c.l.b16 %v1298
      %v1394 = vunpack.c.h.b16 %v1298
      %v1395 = vunpack.c.l.b16 %v1299
      %v1396 = vunpack.c.h.b16 %v1299
      %v1397 = vunpack.c.l.b16 %v1300
      %v1398 = vunpack.c.h.b16 %v1300
      %v1399 = vunpack.c.l.b16 %v1301
      %v1400 = vunpack.c.h.b16 %v1301
      %v1401 = vunpack.c.l.b16 %v1302
      %v1402 = vunpack.c.h.b16 %v1302
      %v1403 = vunpack.c.l.b16 %v1303
      %v1404 = vunpack.c.h.b16 %v1303
      %v1405 = vunpack.c.l.b16 %v1304
      %v1406 = vunpack.c.h.b16 %v1304
      %v1407 = vunpack.c.l.b16 %v1305
      %v1408 = vunpack.c.h.b16 %v1305
      %v1409 = vunpack.c.l.b16 %v1306
      %v1410 = vunpack.c.h.b16 %v1306
      %v1411 = vunpack.c.l.b16 %v1307
      %v1412 = vunpack.c.h.b16 %v1307
      %v1413 = vunpack.c.l.b16 %v1308
      %v1414 = vunpack.c.h.b16 %v1308
      %v1415 = vunpack.c.l.b16 %v1309
      %v1416 = vunpack.c.h.b16 %v1309
      %v1417 = vunpack.c.l.b16 %v1310
      %v1418 = vunpack.c.h.b16 %v1310
      %v1419 = vpack.c.b16 %v1349, %v1347
      %v1420 = vpack.c.b16 %v1350, %v1348
      %v1421 = vpack.c.b16 %v1353, %v1351
      %v1422 = vpack.c.b16 %v1354, %v1352
      %v1423 = vpack.c.b16 %v1357, %v1355
      %v1424 = vpack.c.b16 %v1358, %v1356
      %v1425 = vpack.c.b16 %v1361, %v1359
      %v1426 = vpack.c.b16 %v1362, %v1360
      %v1427 = vpack.c.b16 %v1365, %v1363
      %v1428 = vpack.c.b16 %v1366, %v1364
      %v1429 = vpack.c.b16 %v1369, %v1367
      %v1430 = vpack.c.b16 %v1370, %v1368
      %v1431 = vpack.c.b16 %v1373, %v1371
      %v1432 = vpack.c.b16 %v1374, %v1372
      %v1433 = vpack.c.b16 %v1377, %v1375
      %v1434 = vpack.c.b16 %v1378, %v1376
      %v1435 = vpack.c.b16 %v1381, %v1379
      %v1436 = vpack.c.b16 %v1382, %v1380
      %v1437 = vpack.c.b16 %v1385, %v1383
      %v1438 = vpack.c.b16 %v1386, %v1384
      %v1439 = vpack.c.b16 %v1389, %v1387
      %v1440 = vpack.c.b16 %v1390, %v1388
      %v1441 = vpack.c.b16 %v1393, %v1391
      %v1442 = vpack.c.b16 %v1394, %v1392
      %v1443 = vpack.c.b16 %v1397, %v1395
      %v1444 = vpack.c.b16 %v1398, %v1396
      %v1445 = vpack.c.b16 %v1401, %v1399
      %v1446 = vpack.c.b16 %v1402, %v1400
      %v1447 = vpack.c.b16 %v1405, %v1403
      %v1448 = vpack.c.b16 %v1406, %v1404
      %v1449 = vpack.c.b16 %v1409, %v1407
      %v1450 = vpack.c.b16 %v1410, %v1408
      %v1451 = vpack.c.b16 %v1413, %v1411
      %v1452 = vpack.c.b16 %v1414, %v1412
      %v1453 = vpack.c.b16 %v1417, %v1415
      %v1454 = vpack.c.b16 %v1418, %v1416
      %vm1491 = vcmask 261120
      %v1493 = vsel %vm1491, %v1274, 0
      %1495 = vmatprep.subr.bf16.mxu0 %v1420
      %1496 = vmatpush1.bf16.msra.mxu0 %v1419
      %1497 = vmatprep.subr.bf16.mxu0 %v1422
      %1498 = vmatpush1.bf16.msra.mxu0 %v1421
      %1499 = vmatprep.subr.bf16.mxu0 %v1424
      %1500 = vmatpush1.bf16.msra.mxu0 %v1423
      %1501 = vmatprep.subr.bf16.mxu0 %v1426
      %1502 = vmatpush1.bf16.msra.mxu0 %v1425
      %1503 = vmatprep.subr.bf16.mxu0 %v1428
      %1504 = vmatpush1.bf16.msra.mxu0 %v1427
      %1505 = vmatprep.subr.bf16.mxu0 %v1430
      %1506 = vmatpush1.bf16.msra.mxu0 %v1429
      %1507 = vmatprep.subr.bf16.mxu0 %v1432
      %1508 = vmatpush1.bf16.msra.mxu0 %v1431
      %1509 = vmatprep.subr.bf16.mxu0 %v1434
      %1510 = vmatpush1.bf16.msra.mxu0 %v1433
      %1511 = vmatprep.subr.bf16.mxu0 %v1436
      %1512 = vmatpush1.bf16.msra.mxu0 %v1435
      %1513 = vmatprep.subr.bf16.mxu0 %v1438
      %1514 = vmatpush1.bf16.msra.mxu0 %v1437
      %1515 = vmatprep.subr.bf16.mxu0 %v1440
      %1516 = vmatpush1.bf16.msra.mxu0 %v1439
      %1517 = vmatprep.subr.bf16.mxu0 %v1442
      %1518 = vmatpush1.bf16.msra.mxu0 %v1441
      %1519 = vmatprep.subr.bf16.mxu0 %v1444
      %1520 = vmatpush1.bf16.msra.mxu0 %v1443
      %1521 = vmatprep.subr.bf16.mxu0 %v1446
      %1522 = vmatpush1.bf16.msra.mxu0 %v1445
      %1523 = vmatprep.subr.bf16.mxu0 %v1448
      %1524 = vmatpush1.bf16.msra.mxu0 %v1447
      %1525 = vmatprep.subr.bf16.mxu0 %v1450
      %1526 = vmatpush1.bf16.msra.mxu0 %v1449
      %1527 = vmatprep.mubr.bf16.mxu0 %v1273
      %1528 = vmatmul.mubr.bf16.gmra.mrb[0].mxu0 %v1272
      %v1529 = vpop.f32.mrb[0].mxu0
      %v1530 = vadd.f32 0.0, %v1529
      %v1531 = vpop.f32.mrb[0].mxu0
      %v1532 = vadd.f32 0.0, %v1531
      %v1533 = vpop.f32.mrb[0].mxu0
      %v1534 = vpop.f32.mrb[0].mxu0
      %1535 = vdwg.mxu0
      %1536 = vmatprep.subr.bf16.mxu0 %v1452
      %1537 = vmatpush1.bf16.msra.mxu0 %v1451
      %1538 = vmatprep.subr.bf16.mxu0 %v1454
      %1539 = vmatpush1.bf16.msra.mxu0 %v1453
      %1540 = vmatprep.subr.bf16.mxu0 0
      %1541 = vmatpush1.bf16.msra.mxu0 0
      %1542 = vmatprep.subr.bf16.mxu0 0
      %1543 = vmatpush1.bf16.msra.mxu0 0
      %1544 = vmatprep.subr.bf16.mxu0 0
      %1545 = vmatpush1.bf16.msra.mxu0 0
      %1546 = vmatprep.subr.bf16.mxu0 0
      %1547 = vmatpush1.bf16.msra.mxu0 0
      %1548 = vmatprep.subr.bf16.mxu0 0
      %1549 = vmatpush1.bf16.msra.mxu0 0
      %1550 = vmatprep.subr.bf16.mxu0 0
      %1551 = vmatpush1.bf16.msra.mxu0 0
      %1552 = vmatprep.subr.bf16.mxu0 0
      %1553 = vmatpush1.bf16.msra.mxu0 0
      %1554 = vmatprep.subr.bf16.mxu0 0
      %1555 = vmatpush1.bf16.msra.mxu0 0
      %1556 = vmatprep.subr.bf16.mxu0 0
      %1557 = vmatpush1.bf16.msra.mxu0 0
      %1558 = vmatprep.subr.bf16.mxu0 0
      %1559 = vmatpush1.bf16.msra.mxu0 0
      %1560 = vmatprep.subr.bf16.mxu0 0
      %1561 = vmatpush1.bf16.msra.mxu0 0
      %1562 = vmatprep.subr.bf16.mxu0 0
      %1563 = vmatpush1.bf16.msra.mxu0 0
      %1564 = vmatprep.subr.bf16.mxu0 0
      %1565 = vmatpush1.bf16.msra.mxu0 0
      %1566 = vmatprep.subr.bf16.mxu0 0
      %1567 = vmatpush1.bf16.msra.mxu0 0
      %1568 = vmatprep.mubr.bf16.mxu0 0
      %1569 = vmatmul.mubr.bf16.gmra.mrb[0].mxu0 %v1493
      %v1570 = vpop.f32.mrb[0].mxu0
      %v1571 = vadd.f32 %v1530, %v1570
      %v1572 = vpop.f32.mrb[0].mxu0
      %v1573 = vadd.f32 %v1532, %v1572
      %v1574 = vpop.f32.mrb[0].mxu0
      %v1575 = vpop.f32.mrb[0].mxu0
      %1576 = vdwg.mxu0
      %v1577 = vadd.f32 %v725, %v1571
      %v1578 = vadd.f32 %v727, %v1573
      %v1579 = vld [vmem:[%s6] sm:$0xff]
      %v1580 = vld [vmem:[%s6 + $0x8] sm:$0xf]
      %v1581 = vld [vmem:[%s6 + $0xc] sm:$0xff]
      %v1582 = vld [vmem:[%s6 + $0x14] sm:$0xf]
      %v1583 = vld [vmem:[%s6 + $0x18] sm:$0xff]
      %v1584 = vld [vmem:[%s6 + $0x20] sm:$0xf]
      %v1585 = vld [vmem:[%s6 + $0x24] sm:$0xff]
      %v1586 = vld [vmem:[%s6 + $0x2c] sm:$0xf]
      %v1587 = vld [vmem:[%s6 + $0x30] sm:$0xff]
      %v1588 = vld [vmem:[%s6 + $0x38] sm:$0xf]
      %v1589 = vld [vmem:[%s6 + $0x3c] sm:$0xff]
      %v1590 = vld [vmem:[%s6 + $0x44] sm:$0xf]
      %v1591 = vld [vmem:[%s6 + $0x48] sm:$0xff]
      %v1592 = vld [vmem:[%s6 + $0x50] sm:$0xf]
      %v1593 = vld [vmem:[%s6 + $0x54] sm:$0xff]
      %v1594 = vld [vmem:[%s6 + $0x5c] sm:$0xf]
      %v1595 = vld [vmem:[%s6 + $0x60] sm:$0xff]
      %v1596 = vld [vmem:[%s6 + $0x68] sm:$0xf]
      %v1597 = vld [vmem:[%s6 + $0x6c] sm:$0xff]
      %v1598 = vld [vmem:[%s6 + $0x74] sm:$0xf]
      %v1599 = vld [vmem:[%s6 + $0x78] sm:$0xff]
      %v1600 = vld [vmem:[%s6 + $0x80] sm:$0xf]
      %v1601 = vld [vmem:[%s6 + $0x84] sm:$0xff]
      %v1602 = vld [vmem:[%s6 + $0x8c] sm:$0xf]
      %v1603 = vld [vmem:[%s6 + $0x90] sm:$0xff]
      %v1604 = vld [vmem:[%s6 + $0x98] sm:$0xf]
      %v1605 = vld [vmem:[%s6 + $0x9c] sm:$0xff]
      %v1606 = vld [vmem:[%s6 + $0xa4] sm:$0xf]
      %v1607 = vld [vmem:[%s6 + $0xa8] sm:$0xff]
      %v1608 = vld [vmem:[%s6 + $0xb0] sm:$0xf]
      %v1609 = vld [vmem:[%s6 + $0xb4] sm:$0xff]
      %v1610 = vld [vmem:[%s6 + $0xbc] sm:$0xf]
      %v1611 = vld [vmem:[%s6 + $0xc0] sm:$0xff]
      %v1612 = vld [vmem:[%s6 + $0xc8] sm:$0xf]
      %v1613 = vld [vmem:[%s6 + $0xcc] sm:$0xff]
      %v1614 = vld [vmem:[%s6 + $0xd4] sm:$0xf]
      %v1615 = vld [vmem:[%s6 + $0xd8] sm:$0xff]
      %v1616 = vld [vmem:[%s6 + $0xe0] sm:$0xf]
      %v1617 = vld [vmem:[%s6 + $0xe4] sm:$0xff]
      %v1618 = vld [vmem:[%s6 + $0xec] sm:$0xf]
      %v1619 = vld [vmem:[%s6 + $0xf0] sm:$0xff]
      %v1620 = vld [vmem:[%s6 + $0xf8] sm:$0xf]
      %v1621 = vld [vmem:[%s6 + $0xfc] sm:$0xff]
      %v1622 = vld [vmem:[%s6 + $0x104] sm:$0xf]
      %v1623 = vld [vmem:[%s6 + $0x108] sm:$0xff]
      %v1624 = vld [vmem:[%s6 + $0x110] sm:$0xf]
      %v1625 = vld [vmem:[%s6 + $0x114] sm:$0xff]
      %v1626 = vld [vmem:[%s6 + $0x11c] sm:$0xf]
      %v1627 = vld [vmem:[%s6 + $0x120] sm:$0xff]
      %v1628 = vld [vmem:[%s6 + $0x128] sm:$0xf]
      %v1629 = vld [vmem:[%s6 + $0x12c] sm:$0xff]
      %v1630 = vld [vmem:[%s6 + $0x134] sm:$0xf]
      %v1631 = vld [vmem:[%s6 + $0x138] sm:$0xff]
      %v1632 = vld [vmem:[%s6 + $0x140] sm:$0xf]
      %v1633 = vld [vmem:[%s6 + $0x144] sm:$0xff]
      %v1634 = vld [vmem:[%s6 + $0x14c] sm:$0xf]
      %v1635 = vld [vmem:[%s6 + $0x150] sm:$0xff]
      %v1636 = vld [vmem:[%s6 + $0x158] sm:$0xf]
      %v1637 = vld [vmem:[%s6 + $0x15c] sm:$0xff]
      %v1638 = vld [vmem:[%s6 + $0x164] sm:$0xf]
      %v1639 = vld [vmem:[%s6 + $0x168] sm:$0xff]
      %v1640 = vld [vmem:[%s6 + $0x170] sm:$0xf]
      %v1641 = vld [vmem:[%s6 + $0x174] sm:$0xff]
      %v1642 = vld [vmem:[%s6 + $0x17c] sm:$0xf]
      %v1707 = vunpack.c.l.b16 %v1579
      %v1708 = vunpack.c.h.b16 %v1579
      %v1709 = vunpack.c.l.b16 %v1580
      %v1710 = vunpack.c.l.b16 %v1581
      %v1711 = vunpack.c.h.b16 %v1581
      %v1712 = vunpack.c.l.b16 %v1582
      %v1713 = vunpack.c.l.b16 %v1583
      %v1714 = vunpack.c.h.b16 %v1583
      %v1715 = vunpack.c.l.b16 %v1584
      %v1716 = vunpack.c.l.b16 %v1585
      %v1717 = vunpack.c.h.b16 %v1585
      %v1718 = vunpack.c.l.b16 %v1586
      %v1719 = vunpack.c.l.b16 %v1587
      %v1720 = vunpack.c.h.b16 %v1587
      %v1721 = vunpack.c.l.b16 %v1588
      %v1722 = vunpack.c.l.b16 %v1589
      %v1723 = vunpack.c.h.b16 %v1589
      %v1724 = vunpack.c.l.b16 %v1590
      %v1725 = vunpack.c.l.b16 %v1591
      %v1726 = vunpack.c.h.b16 %v1591
      %v1727 = vunpack.c.l.b16 %v1592
      %v1728 = vunpack.c.l.b16 %v1593
      %v1729 = vunpack.c.h.b16 %v1593
      %v1730 = vunpack.c.l.b16 %v1594
      %v1731 = vunpack.c.l.b16 %v1595
      %v1732 = vunpack.c.h.b16 %v1595
      %v1733 = vunpack.c.l.b16 %v1596
      %v1734 = vunpack.c.l.b16 %v1597
      %v1735 = vunpack.c.h.b16 %v1597
      %v1736 = vunpack.c.l.b16 %v1598
      %v1737 = vunpack.c.l.b16 %v1599
      %v1738 = vunpack.c.h.b16 %v1599
      %v1739 = vunpack.c.l.b16 %v1600
      %v1740 = vunpack.c.l.b16 %v1601
      %v1741 = vunpack.c.h.b16 %v1601
      %v1742 = vunpack.c.l.b16 %v1602
      %v1743 = vunpack.c.l.b16 %v1603
      %v1744 = vunpack.c.h.b16 %v1603
      %v1745 = vunpack.c.l.b16 %v1604
      %v1746 = vunpack.c.l.b16 %v1605
      %v1747 = vunpack.c.h.b16 %v1605
      %v1748 = vunpack.c.l.b16 %v1606
      %v1749 = vunpack.c.l.b16 %v1607
      %v1750 = vunpack.c.h.b16 %v1607
      %v1751 = vunpack.c.l.b16 %v1608
      %v1752 = vunpack.c.l.b16 %v1609
      %v1753 = vunpack.c.h.b16 %v1609
      %v1754 = vunpack.c.l.b16 %v1610
      %v1755 = vunpack.c.l.b16 %v1611
      %v1756 = vunpack.c.h.b16 %v1611
      %v1757 = vunpack.c.l.b16 %v1612
      %v1758 = vunpack.c.l.b16 %v1613
      %v1759 = vunpack.c.h.b16 %v1613
      %v1760 = vunpack.c.l.b16 %v1614
      %v1761 = vunpack.c.l.b16 %v1615
      %v1762 = vunpack.c.h.b16 %v1615
      %v1763 = vunpack.c.l.b16 %v1616
      %v1764 = vunpack.c.l.b16 %v1617
      %v1765 = vunpack.c.h.b16 %v1617
      %v1766 = vunpack.c.l.b16 %v1618
      %v1767 = vunpack.c.l.b16 %v1619
      %v1768 = vunpack.c.h.b16 %v1619
      %v1769 = vunpack.c.l.b16 %v1620
      %v1770 = vunpack.c.l.b16 %v1621
      %v1771 = vunpack.c.h.b16 %v1621
      %v1772 = vunpack.c.l.b16 %v1622
      %v1773 = vunpack.c.l.b16 %v1623
      %v1774 = vunpack.c.h.b16 %v1623
      %v1775 = vunpack.c.l.b16 %v1624
      %v1776 = vunpack.c.l.b16 %v1625
      %v1777 = vunpack.c.h.b16 %v1625
      %v1778 = vunpack.c.l.b16 %v1626
      %v1779 = vunpack.c.l.b16 %v1627
      %v1780 = vunpack.c.h.b16 %v1627
      %v1781 = vunpack.c.l.b16 %v1628
      %v1782 = vunpack.c.l.b16 %v1629
      %v1783 = vunpack.c.h.b16 %v1629
      %v1784 = vunpack.c.l.b16 %v1630
      %v1785 = vunpack.c.l.b16 %v1631
      %v1786 = vunpack.c.h.b16 %v1631
      %v1787 = vunpack.c.l.b16 %v1632
      %v1788 = vunpack.c.l.b16 %v1633
      %v1789 = vunpack.c.h.b16 %v1633
      %v1790 = vunpack.c.l.b16 %v1634
      %v1791 = vunpack.c.l.b16 %v1635
      %v1792 = vunpack.c.h.b16 %v1635
      %v1793 = vunpack.c.l.b16 %v1636
      %v1794 = vunpack.c.l.b16 %v1637
      %v1795 = vunpack.c.h.b16 %v1637
      %v1796 = vunpack.c.l.b16 %v1638
      %v1797 = vunpack.c.l.b16 %v1639
      %v1798 = vunpack.c.h.b16 %v1639
      %v1799 = vunpack.c.l.b16 %v1640
      %v1800 = vunpack.c.l.b16 %v1641
      %v1801 = vunpack.c.h.b16 %v1641
      %v1802 = vunpack.c.l.b16 %v1642
      %v1803 = vpack.c.b16 %v1710, %v1707
      %v1804 = vpack.c.b16 %v1711, %v1708
      %v1805 = vpack.c.b16 %v1712, %v1709
      %v1806 = vpack.c.b16 %v1716, %v1713
      %v1807 = vpack.c.b16 %v1717, %v1714
      %v1808 = vpack.c.b16 %v1718, %v1715
      %v1809 = vpack.c.b16 %v1722, %v1719
      %v1810 = vpack.c.b16 %v1723, %v1720
      %v1811 = vpack.c.b16 %v1724, %v1721
      %v1812 = vpack.c.b16 %v1728, %v1725
      %v1813 = vpack.c.b16 %v1729, %v1726
      %v1814 = vpack.c.b16 %v1730, %v1727
      %v1815 = vpack.c.b16 %v1734, %v1731
      %v1816 = vpack.c.b16 %v1735, %v1732
      %v1817 = vpack.c.b16 %v1736, %v1733
      %v1818 = vpack.c.b16 %v1740, %v1737
      %v1819 = vpack.c.b16 %v1741, %v1738
      %v1820 = vpack.c.b16 %v1742, %v1739
      %v1821 = vpack.c.b16 %v1746, %v1743
      %v1822 = vpack.c.b16 %v1747, %v1744
      %v1823 = vpack.c.b16 %v1748, %v1745
      %v1824 = vpack.c.b16 %v1752, %v1749
      %v1825 = vpack.c.b16 %v1753, %v1750
      %v1826 = vpack.c.b16 %v1754, %v1751
      %v1827 = vpack.c.b16 %v1758, %v1755
      %v1828 = vpack.c.b16 %v1759, %v1756
      %v1829 = vpack.c.b16 %v1760, %v1757
      %v1830 = vpack.c.b16 %v1764, %v1761
      %v1831 = vpack.c.b16 %v1765, %v1762
      %v1832 = vpack.c.b16 %v1766, %v1763
      %v1833 = vpack.c.b16 %v1770, %v1767
      %v1834 = vpack.c.b16 %v1771, %v1768
      %v1835 = vpack.c.b16 %v1772, %v1769
      %v1836 = vpack.c.b16 %v1776, %v1773
      %v1837 = vpack.c.b16 %v1777, %v1774
      %v1838 = vpack.c.b16 %v1778, %v1775
      %v1839 = vpack.c.b16 %v1782, %v1779
      %v1840 = vpack.c.b16 %v1783, %v1780
      %v1841 = vpack.c.b16 %v1784, %v1781
      %v1842 = vpack.c.b16 %v1788, %v1785
      %v1843 = vpack.c.b16 %v1789, %v1786
      %v1844 = vpack.c.b16 %v1790, %v1787
      %v1845 = vpack.c.b16 %v1794, %v1791
      %v1846 = vpack.c.b16 %v1795, %v1792
      %v1847 = vpack.c.b16 %v1796, %v1793
      %v1848 = vpack.c.b16 %v1800, %v1797
      %v1849 = vpack.c.b16 %v1801, %v1798
      %v1850 = vpack.c.b16 %v1802, %v1799
      %1899 = vmatprep.subr.bf16.mxu0 %v1804
      %1900 = vmatpush1.bf16.msra.mxu0 %v1803
      %1901 = vmatprep.subr.bf16.mxu0 %v1807
      %1902 = vmatpush1.bf16.msra.mxu0 %v1806
      %1903 = vmatprep.subr.bf16.mxu0 %v1810
      %1904 = vmatpush1.bf16.msra.mxu0 %v1809
      %1905 = vmatprep.subr.bf16.mxu0 %v1813
      %1906 = vmatpush1.bf16.msra.mxu0 %v1812
      %1907 = vmatprep.subr.bf16.mxu0 %v1816
      %1908 = vmatpush1.bf16.msra.mxu0 %v1815
      %1909 = vmatprep.subr.bf16.mxu0 %v1819
      %1910 = vmatpush1.bf16.msra.mxu0 %v1818
      %1911 = vmatprep.subr.bf16.mxu0 %v1822
      %1912 = vmatpush1.bf16.msra.mxu0 %v1821
      %1913 = vmatprep.subr.bf16.mxu0 %v1825
      %1914 = vmatpush1.bf16.msra.mxu0 %v1824
      %1915 = vmatprep.subr.bf16.mxu0 %v1828
      %1916 = vmatpush1.bf16.msra.mxu0 %v1827
      %1917 = vmatprep.subr.bf16.mxu0 %v1831
      %1918 = vmatpush1.bf16.msra.mxu0 %v1830
      %1919 = vmatprep.subr.bf16.mxu0 %v1834
      %1920 = vmatpush1.bf16.msra.mxu0 %v1833
      %1921 = vmatprep.subr.bf16.mxu0 %v1837
      %1922 = vmatpush1.bf16.msra.mxu0 %v1836
      %1923 = vmatprep.subr.bf16.mxu0 %v1840
      %1924 = vmatpush1.bf16.msra.mxu0 %v1839
      %1925 = vmatprep.subr.bf16.mxu0 %v1843
      %1926 = vmatpush1.bf16.msra.mxu0 %v1842
      %1927 = vmatprep.subr.bf16.mxu0 %v1846
      %1928 = vmatpush1.bf16.msra.mxu0 %v1845
      %1929 = vmatprep.subr.bf16.mxu0 %v1849
      %1930 = vmatpush1.bf16.msra.mxu0 %v1848
      %1931 = vmatprep.mubr.bf16.mxu0 %v729
      %1932 = vmatmul.mubr.bf16.gmra.mrb[0].mxu0 %v728
      %v1933 = vpop.f32.mrb[0].mxu0
      %v1934 = vadd.f32 0.0, %v1933
      %v1935 = vpop.f32.mrb[0].mxu0
      %v1936 = vadd.f32 0.0, %v1935
      %v1937 = vpop.f32.mrb[0].mxu0
      %v1938 = vpop.f32.mrb[0].mxu0
      %1939 = vdwg.mxu0
      %1940 = vmatprep.subr.bf16.mxu0 0
      %1941 = vmatpush1.bf16.msra.mxu0 %v1805
      %1942 = vmatprep.subr.bf16.mxu0 0
      %1943 = vmatpush1.bf16.msra.mxu0 %v1808
      %1944 = vmatprep.subr.bf16.mxu0 0
      %1945 = vmatpush1.bf16.msra.mxu0 %v1811
      %1946 = vmatprep.subr.bf16.mxu0 0
      %1947 = vmatpush1.bf16.msra.mxu0 %v1814
      %1948 = vmatprep.subr.bf16.mxu0 0
      %1949 = vmatpush1.bf16.msra.mxu0 %v1817
      %1950 = vmatprep.subr.bf16.mxu0 0
      %1951 = vmatpush1.bf16.msra.mxu0 %v1820
      %1952 = vmatprep.subr.bf16.mxu0 0
      %1953 = vmatpush1.bf16.msra.mxu0 %v1823
      %1954 = vmatprep.subr.bf16.mxu0 0
      %1955 = vmatpush1.bf16.msra.mxu0 %v1826
      %1956 = vmatprep.subr.bf16.mxu0 0
      %1957 = vmatpush1.bf16.msra.mxu0 %v1829
      %1958 = vmatprep.subr.bf16.mxu0 0
      %1959 = vmatpush1.bf16.msra.mxu0 %v1832
      %1960 = vmatprep.subr.bf16.mxu0 0
      %1961 = vmatpush1.bf16.msra.mxu0 %v1835
      %1962 = vmatprep.subr.bf16.mxu0 0
      %1963 = vmatpush1.bf16.msra.mxu0 %v1838
      %1964 = vmatprep.subr.bf16.mxu0 0
      %1965 = vmatpush1.bf16.msra.mxu0 %v1841
      %1966 = vmatprep.subr.bf16.mxu0 0
      %1967 = vmatpush1.bf16.msra.mxu0 %v1844
      %1968 = vmatprep.subr.bf16.mxu0 0
      %1969 = vmatpush1.bf16.msra.mxu0 %v1847
      %1970 = vmatprep.subr.bf16.mxu0 0
      %1971 = vmatpush1.bf16.msra.mxu0 %v1850
      %1972 = vmatprep.mubr.bf16.mxu0 %v729
      %1973 = vmatmul.mubr.bf16.gmra.mrb[0].mxu0 %v728
      %v1974 = vpop.f32.mrb[0].mxu0
      %v1975 = vadd.f32 0.0, %v1974
      %v1976 = vpop.f32.mrb[0].mxu0
      %v1977 = vpop.f32.mrb[0].mxu0
      %v1978 = vpop.f32.mrb[0].mxu0
      %1979 = vdwg.mxu0
      %v1981 = vrot.slane %v1934, 7
      %1982 = vrot.lane.b32.xlu0 %v1981, 88
      %v1983 = vpop.permute.xlu0 %1982
      %v1985 = vrot.slane %v1934, 6
      %1986 = vrot.lane.b32.xlu0 %v1985, 48
      %v1987 = vpop.permute.xlu0 %1986
      %v1990 = vrot.slane %v1934, 5
      %v1991 = vrot.slane %v1936, 5
      %1992 = vrot.lane.b32.xlu0 %v1990, 8
      %v1993 = vpop.permute.xlu0 %1992
      %1994 = vrot.lane.b32.xlu0 %v1991, 8
      %v1995 = vpop.permute.xlu0 %1994
      %v1996 = vsel %vm602, %v1993, %v1995
      %v1998 = vrot.slane %v1936, 4
      %1999 = vrot.lane.b32.xlu0 %v1998, 96
      %v2000 = vpop.permute.xlu0 %1999
      %v2002 = vrot.slane %v1936, 3
      %2003 = vrot.lane.b32.xlu0 %v2002, 56
      %v2004 = vpop.permute.xlu0 %2003
      %v2007 = vrot.slane %v1936, 2
      %v2008 = vrot.slane %v1975, 2
      %2009 = vrot.lane.b32.xlu0 %v2007, 16
      %v2010 = vpop.permute.xlu0 %2009
      %2011 = vrot.lane.b32.xlu0 %v2008, 16
      %v2012 = vpop.permute.xlu0 %2011
      %v2013 = vsel %vm552, %v2010, %v2012
      %v2015 = vrot.slane %v1975, 1
      %2016 = vrot.lane.b32.xlu0 %v2015, 104
      %v2017 = vpop.permute.xlu0 %2016
      %vm2019 = vcmask 1040384
      %v2020 = vsel %vm2019, %v1934, %v1983
      %vm2021 = vcmask 1041408
      %v2022 = vsel %vm2021, %v2020, %v1987
      %vm2023 = vcmask 1042432
      %v2024 = vsel %vm2023, %v2022, %v1996
      %v2025 = vsel %vm606, %v2024, %v2000
      %vm2026 = vcmask 1044480
      %v2027 = vsel %vm2026, %v2025, %v2004
      %vm2028 = vcmask 1045504
      %v2029 = vsel %vm2028, %v2027, %v2013
      %vm2030 = vcmask 1046528
      %v2031 = vsel %vm2030, %v2029, %v2017
      %v2032 = vld [vmem:[%s7] sm:$0xf]
      %v2033 = vpack.c.bf16 %v2031, %v2031
      %v2035 = vsel %vm602, %v2032, 0
      %v2038 = vsel %vm606, %v2033, 0
      %2040 = vmatprep.subr.bf16.mxu0 0
      %2041 = vmatpush1.bf16.msra.mxu0 %v2038
      %2042 = vmatprep.subr.bf16.mxu0 0
      %2043 = vmatpush1.bf16.msra.mxu0 0
      %2044 = vmatprep.subr.bf16.mxu0 0
      %2045 = vmatpush1.bf16.msra.mxu0 0
      %2046 = vmatprep.subr.bf16.mxu0 0
      %2047 = vmatpush1.bf16.msra.mxu0 0
      %2048 = vmatprep.subr.bf16.mxu0 0
      %2049 = vmatpush1.bf16.msra.mxu0 0
      %2050 = vmatprep.subr.bf16.mxu0 0
      %2051 = vmatpush1.bf16.msra.mxu0 0
      %2052 = vmatprep.subr.bf16.mxu0 0
      %2053 = vmatpush1.bf16.msra.mxu0 0
      %2054 = vmatprep.subr.bf16.mxu0 0
      %2055 = vmatpush1.bf16.msra.mxu0 0
      %2056 = vmatprep.subr.bf16.mxu0 0
      %2057 = vmatpush1.bf16.msra.mxu0 0
      %2058 = vmatprep.subr.bf16.mxu0 0
      %2059 = vmatpush1.bf16.msra.mxu0 0
      %2060 = vmatprep.subr.bf16.mxu0 0
      %2061 = vmatpush1.bf16.msra.mxu0 0
      %2062 = vmatprep.subr.bf16.mxu0 0
      %2063 = vmatpush1.bf16.msra.mxu0 0
      %2064 = vmatprep.subr.bf16.mxu0 0
      %2065 = vmatpush1.bf16.msra.mxu0 0
      %2066 = vmatprep.subr.bf16.mxu0 0
      %2067 = vmatpush1.bf16.msra.mxu0 0
      %2068 = vmatprep.subr.bf16.mxu0 0
      %2069 = vmatpush1.bf16.msra.mxu0 0
      %2070 = vmatprep.subr.bf16.mxu0 0
      %2071 = vmatpush1.bf16.msra.mxu0 0
      %2072 = vmatprep.mubr.bf16.mxu0 0
      %2073 = vmatmul.mubr.bf16.gmra.mrb[0].mxu0 %v2035
      %v2074 = vpop.f32.mrb[0].mxu0
      %v2075 = vadd.f32 0.0, %v2074
      %v2076 = vpop.f32.mrb[0].mxu0
      %v2077 = vpop.f32.mrb[0].mxu0
      %v2078 = vpop.f32.mrb[0].mxu0
      %2079 = vdwg.mxu0
      %vm2080 = vcmask 326656
      %v2081 = vsel %vm2080, %v2075, 0.0
      %v2082 = vrot.slane %v2081, 4
      %v2083 = vadd.f32 %v2081, %v2082
      %v2084 = vrot.slane %v2083, 2
      %v2085 = vadd.f32 %v2083, %v2084
      %v2086 = vrot.slane %v2085, 1
      %v2087 = vadd.f32 %v2085, %v2086
      %v2088 = vmul.f32 %v2087, %v1211
      %v2089 = vsub.f32 %v2075, %v2088
      %v2090 = vmul.f32 %v2089, %v2089
      %v2091 = vsel %vm2080, %v2090, 0.0
      %v2092 = vrot.slane %v2091, 4
      %v2093 = vadd.f32 %v2091, %v2092
      %v2094 = vrot.slane %v2093, 2
      %v2095 = vadd.f32 %v2093, %v2094
      %v2096 = vrot.slane %v2095, 1
      %v2097 = vadd.f32 %v2095, %v2096
      %v2098 = vmul.f32 %v2097, %v1211
      %v2099 = vadd.f32 %v2098, 1e-05
      %v2100 = vrsqrt.pop %v2099
      %v2101 = vmul.f32 %v2089, %v2100
      %2103 = vset.pattern.permute.xlu0 0
      %2104 = vperm.xlu0 %2103, %v430
      %v2105 = vpop.permute.xlu0 %2104
      %v2106 = vrot.slane %v2105, 4
      %v2107 = vsel %vm606, %v1244, %v2106
      %v2109 = vmul.f32 %v2101, %v2107
      %2110 = vset.pattern.permute.xlu0 1
      %2111 = vperm.xlu0 %2110, %v430
      %v2112 = vpop.permute.xlu0 %2111
      %v2113 = vrot.slane %v2112, 4
      %v2114 = vsel %vm606, %v1253, %v2113
      %v2116 = vadd.f32 %v2109, %v2114
      %v2117 = vmax.f32 %v2116, 0.0
      %v2119 = vrot.slane %v2117, 4
      %2120 = vrot.lane.b32.xlu0 %v2119, 40
      %v2121 = vpop.permute.xlu0 %2120
      %v2123 = vsel %vm2080, %v2117, %v2121
      %v2124 = vpack.c.bf16 %v2123, %v2123
      %v2125 = vld [vmem:[%s8] sm:$0xff]
      %v2126 = vld [vmem:[%s8 + $0x8] sm:$0xff]
      %v2127 = vld [vmem:[%s8 + $0x10] sm:$0xff]
      %v2128 = vld [vmem:[%s8 + $0x18] sm:$0xff]
      %v2129 = vld [vmem:[%s8 + $0x20] sm:$0xff]
      %v2130 = vld [vmem:[%s8 + $0x28] sm:$0xff]
      %v2131 = vld [vmem:[%s8 + $0x30] sm:$0xff]
      %v2132 = vld [vmem:[%s8 + $0x38] sm:$0xff]
      %v2133 = vld [vmem:[%s8 + $0x40] sm:$0xff]
      %v2134 = vld [vmem:[%s8 + $0x48] sm:$0xff]
      %v2145 = vunpack.c.l.b16 %v2125
      %v2146 = vunpack.c.h.b16 %v2125
      %v2147 = vunpack.c.l.b16 %v2126
      %v2148 = vunpack.c.h.b16 %v2126
      %v2149 = vunpack.c.l.b16 %v2127
      %v2150 = vunpack.c.h.b16 %v2127
      %v2151 = vunpack.c.l.b16 %v2128
      %v2152 = vunpack.c.h.b16 %v2128
      %v2153 = vunpack.c.l.b16 %v2129
      %v2154 = vunpack.c.h.b16 %v2129
      %v2155 = vunpack.c.l.b16 %v2130
      %v2156 = vunpack.c.h.b16 %v2130
      %v2157 = vunpack.c.l.b16 %v2131
      %v2158 = vunpack.c.h.b16 %v2131
      %v2159 = vunpack.c.l.b16 %v2132
      %v2160 = vunpack.c.h.b16 %v2132
      %v2161 = vunpack.c.l.b16 %v2133
      %v2162 = vunpack.c.h.b16 %v2133
      %v2163 = vunpack.c.l.b16 %v2134
      %v2164 = vunpack.c.h.b16 %v2134
      %v2165 = vpack.c.b16 %v2147, %v2145
      %v2166 = vpack.c.b16 %v2148, %v2146
      %v2167 = vpack.c.b16 %v2151, %v2149
      %v2168 = vpack.c.b16 %v2152, %v2150
      %v2169 = vpack.c.b16 %v2155, %v2153
      %v2170 = vpack.c.b16 %v2156, %v2154
      %v2171 = vpack.c.b16 %v2159, %v2157
      %v2172 = vpack.c.b16 %v2160, %v2158
      %v2173 = vpack.c.b16 %v2163, %v2161
      %v2174 = vpack.c.b16 %v2164, %v2162
      %vm2185 = vcmask 654336
      %v2187 = vsel %vm2185, %v2124, 0
      %2189 = vmatprep.subr.bf16.mxu0 %v2166
      %2190 = vmatpush1.bf16.msra.mxu0 %v2165
      %2191 = vmatprep.subr.bf16.mxu0 %v2168
      %2192 = vmatpush1.bf16.msra.mxu0 %v2167
      %2193 = vmatprep.subr.bf16.mxu0 %v2170
      %2194 = vmatpush1.bf16.msra.mxu0 %v2169
      %2195 = vmatprep.subr.bf16.mxu0 %v2172
      %2196 = vmatpush1.bf16.msra.mxu0 %v2171
      %2197 = vmatprep.subr.bf16.mxu0 %v2174
      %2198 = vmatpush1.bf16.msra.mxu0 %v2173
      %2199 = vmatprep.subr.bf16.mxu0 0
      %2200 = vmatpush1.bf16.msra.mxu0 0
      %2201 = vmatprep.subr.bf16.mxu0 0
      %2202 = vmatpush1.bf16.msra.mxu0 0
      %2203 = vmatprep.subr.bf16.mxu0 0
      %2204 = vmatpush1.bf16.msra.mxu0 0
      %2205 = vmatprep.subr.bf16.mxu0 0
      %2206 = vmatpush1.bf16.msra.mxu0 0
      %2207 = vmatprep.subr.bf16.mxu0 0
      %2208 = vmatpush1.bf16.msra.mxu0 0
      %2209 = vmatprep.subr.bf16.mxu0 0
      %2210 = vmatpush1.bf16.msra.mxu0 0
      %2211 = vmatprep.subr.bf16.mxu0 0
      %2212 = vmatpush1.bf16.msra.mxu0 0
      %2213 = vmatprep.subr.bf16.mxu0 0
      %2214 = vmatpush1.bf16.msra.mxu0 0
      %2215 = vmatprep.subr.bf16.mxu0 0
      %2216 = vmatpush1.bf16.msra.mxu0 0
      %2217 = vmatprep.subr.bf16.mxu0 0
      %2218 = vmatpush1.bf16.msra.mxu0 0
      %2219 = vmatprep.subr.bf16.mxu0 0
      %2220 = vmatpush1.bf16.msra.mxu0 0
      %2221 = vmatprep.mubr.bf16.mxu0 0
      %2222 = vmatmul.mubr.bf16.gmra.mrb[0].mxu0 %v2187
      %v2223 = vpop.f32.mrb[0].mxu0
      %v2224 = vadd.f32 0.0, %v2223
      %v2225 = vpop.f32.mrb[0].mxu0
      %v2226 = vadd.f32 0.0, %v2225
      %v2227 = vpop.f32.mrb[0].mxu0
      %v2228 = vpop.f32.mrb[0].mxu0
      %2229 = vdwg.mxu0
      %v2230 = vadd.f32 %v1577, %v2224
      %v2231 = vadd.f32 %v1578, %v2226
      %v2232 = vld [vmem:[%s9] sm:$0xf]
      %v2233 = vpack.c.bf16 %v2230, %v2230
      %v2234 = vpack.c.bf16 %v2231, %v2231
      %vm2235 = vcmask 31744
      %v2237 = vsel %vm2235, %v2232, 0
      %v2240 = vsel %vm2021, %v2233, 0
      %v2243 = vsel %vm2021, %v2234, 0
      %2245 = vmatprep.subr.bf16.mxu0 %v2243
      %2246 = vmatpush1.bf16.msra.mxu0 %v2240
      %2247 = vmatprep.subr.bf16.mxu0 0
      %2248 = vmatpush1.bf16.msra.mxu0 0
      %2249 = vmatprep.subr.bf16.mxu0 0
      %2250 = vmatpush1.bf16.msra.mxu0 0
      %2251 = vmatprep.subr.bf16.mxu0 0
      %2252 = vmatpush1.bf16.msra.mxu0 0
      %2253 = vmatprep.subr.bf16.mxu0 0
      %2254 = vmatpush1.bf16.msra.mxu0 0
      %2255 = vmatprep.subr.bf16.mxu0 0
      %2256 = vmatpush1.bf16.msra.mxu0 0
      %2257 = vmatprep.subr.bf16.mxu0 0
      %2258 = vmatpush1.bf16.msra.mxu0 0
      %2259 = vmatprep.subr.bf16.mxu0 0
      %2260 = vmatpush1.bf16.msra.mxu0 0
      %2261 = vmatprep.subr.bf16.mxu0 0
      %2262 = vmatpush1.bf16.msra.mxu0 0
      %2263 = vmatprep.subr.bf16.mxu0 0
      %2264 = vmatpush1.bf16.msra.mxu0 0
      %2265 = vmatprep.subr.bf16.mxu0 0
      %2266 = vmatpush1.bf16.msra.mxu0 0
      %2267 = vmatprep.subr.bf16.mxu0 0
      %2268 = vmatpush1.bf16.msra.mxu0 0
      %2269 = vmatprep.subr.bf16.mxu0 0
      %2270 = vmatpush1.bf16.msra.mxu0 0
      %2271 = vmatprep.subr.bf16.mxu0 0
      %2272 = vmatpush1.bf16.msra.mxu0 0
      %2273 = vmatprep.subr.bf16.mxu0 0
      %2274 = vmatpush1.bf16.msra.mxu0 0
      %2275 = vmatprep.subr.bf16.mxu0 0
      %2276 = vmatpush1.bf16.msra.mxu0 0
      %2277 = vmatprep.mubr.bf16.mxu0 0
      %2278 = vmatmul.mubr.bf16.gmra.mrb[0].mxu0 %v2237
      %v2279 = vpop.f32.mrb[0].mxu0
      %v2280 = vadd.f32 0.0, %v2279
      %v2281 = vpop.f32.mrb[0].mxu0
      %v2282 = vadd.f32 0.0, %v2281
      %v2283 = vpop.f32.mrb[0].mxu0
      %v2284 = vpop.f32.mrb[0].mxu0
      %2285 = vdwg.mxu0
      %v2286 = vadd.f32 %v595, %v2280
      %v2287 = vadd.f32 %v597, %v2282
      %v2288 = vrot.slane %v591, 4
      %v2289 = vadd.f32 %v591, %v2288
      %v2290 = vrot.slane %v2289, 2
      %v2291 = vadd.f32 %v2289, %v2290
      %v2292 = vrot.slane %v2291, 1
      %v2293 = vadd.f32 %v2291, %v2292
      %v2294 = vrot.slane %v593, 4
      %v2295 = vadd.f32 %v593, %v2294
      %v2296 = vrot.slane %v2295, 2
      %v2297 = vadd.f32 %v2295, %v2296
      %v2298 = vrot.slane %v2297, 1
      %v2299 = vadd.f32 %v2297, %v2298
      %v2300 = vmul.f32 %v2293, %v1211
      %v2301 = vmul.f32 %v2299, %v1211
      %v2302 = vsub.f32 %v591, %v2300
      %v2303 = vsub.f32 %v593, %v2301
      %v2304 = vmul.f32 %v2302, %v2302
      %v2305 = vmul.f32 %v2303, %v2303
      %v2306 = vrot.slane %v2304, 4
      %v2307 = vadd.f32 %v2304, %v2306
      %v2308 = vrot.slane %v2307, 2
      %v2309 = vadd.f32 %v2307, %v2308
      %v2310 = vrot.slane %v2309, 1
      %v2311 = vadd.f32 %v2309, %v2310
      %v2312 = vrot.slane %v2305, 4
      %v2313 = vadd.f32 %v2305, %v2312
      %v2314 = vrot.slane %v2313, 2
      %v2315 = vadd.f32 %v2313, %v2314
      %v2316 = vrot.slane %v2315, 1
      %v2317 = vadd.f32 %v2315, %v2316
      %v2318 = vmul.f32 %v2311, %v1211
      %v2319 = vmul.f32 %v2317, %v1211
      %v2320 = vadd.f32 %v2318, 1e-05
      %v2321 = vadd.f32 %v2319, 1e-05
      %v2322 = vrsqrt.pop %v2320
      %v2323 = vrsqrt.pop %v2321
      %v2324 = vmul.f32 %v2302, %v2322
      %v2325 = vmul.f32 %v2303, %v2323
      %2327 = vset.pattern.permute.xlu0 0
      %2328 = vperm.xlu0 %2327, %v431
      %v2329 = vpop.permute.xlu0 %2328
      %v2330 = vrot.slane %v2329, 4
      %v2331 = vsel %vm606, %v2106, %v2330
      %v2333 = vmul.f32 %v2324, %v2331
      %v2334 = vmul.f32 %v2325, %v2331
      %2335 = vset.pattern.permute.xlu0 1
      %2336 = vperm.xlu0 %2335, %v431
      %v2337 = vpop.permute.xlu0 %2336
      %v2338 = vrot.slane %v2337, 4
      %v2339 = vsel %vm606, %v2113, %v2338
      %v2341 = vadd.f32 %v2333, %v2339
      %v2342 = vadd.f32 %v2334, %v2339
      %v2343 = vmin.f32 %v2341, 20.0
      %v2344 = vmin.f32 %v2342, 20.0
      %v2345 = vmul.f32 %v2343, 1.442695
      %v2346 = vpow.pop %v2345
      %v2347 = vmul.f32 %v2344, 1.442695
      %v2348 = vpow.pop %v2347
      %v2349 = vadd.f32 %v2346, 2.0
      %v2350 = vadd.f32 %v2348, 2.0
      %v2351 = vmul.f32 %v2346, %v2349
      %v2352 = vmul.f32 %v2348, %v2350
      %v2353 = vmul.f32 %v2341, %v2351
      %v2354 = vmul.f32 %v2342, %v2352
      %v2355 = vadd.f32 %v2351, 2.0
      %v2356 = vadd.f32 %v2352, 2.0
      %v2357 = vrcp.pop %v2355
      %v2358 = vmul.f32 %v2353, %v2357
      %v2359 = vrcp.pop %v2356
      %v2360 = vmul.f32 %v2354, %v2359
      %2361 = vst [vmem:[%s421] sm:$0xff] %v2358
      %2362 = vst [vmem:[%s421 + $0x8] sm:$0xff] %v2360
      %v2363 = vrot.slane %v2286, 4
      %v2364 = vadd.f32 %v2286, %v2363
      %v2365 = vrot.slane %v2364, 2
      %v2366 = vadd.f32 %v2364, %v2365
      %v2367 = vrot.slane %v2366, 1
      %v2368 = vadd.f32 %v2366, %v2367
      %v2369 = vrot.slane %v2287, 4
      %v2370 = vadd.f32 %v2287, %v2369
      %v2371 = vrot.slane %v2370, 2
      %v2372 = vadd.f32 %v2370, %v2371
      %v2373 = vrot.slane %v2372, 1
      %v2374 = vadd.f32 %v2372, %v2373
      %v2375 = vmul.f32 %v2368, %v1211
      %v2376 = vmul.f32 %v2374, %v1211
      %v2377 = vsub.f32 %v2286, %v2375
      %v2378 = vsub.f32 %v2287, %v2376
      %v2379 = vmul.f32 %v2377, %v2377
      %v2380 = vmul.f32 %v2378, %v2378
      %v2381 = vrot.slane %v2379, 4
      %v2382 = vadd.f32 %v2379, %v2381
      %v2383 = vrot.slane %v2382, 2
      %v2384 = vadd.f32 %v2382, %v2383
      %v2385 = vrot.slane %v2384, 1
      %v2386 = vadd.f32 %v2384, %v2385
      %v2387 = vrot.slane %v2380, 4
      %v2388 = vadd.f32 %v2380, %v2387
      %v2389 = vrot.slane %v2388, 2
      %v2390 = vadd.f32 %v2388, %v2389
      %v2391 = vrot.slane %v2390, 1
      %v2392 = vadd.f32 %v2390, %v2391
      %v2393 = vmul.f32 %v2386, %v1211
      %v2394 = vmul.f32 %v2392, %v1211
      %v2395 = vadd.f32 %v2393, 1e-05
      %v2396 = vadd.f32 %v2394, 1e-05
      %v2397 = vrsqrt.pop %v2395
      %v2398 = vrsqrt.pop %v2396
      %v2399 = vmul.f32 %v2377, %v2397
      %v2400 = vmul.f32 %v2378, %v2398
      %2402 = vset.pattern.permute.xlu0 0
      %2403 = vperm.xlu0 %2402, %v432
      %v2404 = vpop.permute.xlu0 %2403
      %v2405 = vrot.slane %v2404, 4
      %v2406 = vsel %vm606, %v2330, %v2405
      %v2408 = vmul.f32 %v2399, %v2406
      %v2409 = vmul.f32 %v2400, %v2406
      %2410 = vset.pattern.permute.xlu0 1
      %2411 = vperm.xlu0 %2410, %v432
      %v2412 = vpop.permute.xlu0 %2411
      %v2413 = vrot.slane %v2412, 4
      %v2414 = vsel %vm606, %v2338, %v2413
      %v2416 = vadd.f32 %v2408, %v2414
      %v2417 = vadd.f32 %v2409, %v2414
      %v2418 = vmin.f32 %v2416, 20.0
      %v2419 = vmin.f32 %v2417, 20.0
      %v2420 = vmul.f32 %v2418, 1.442695
      %v2421 = vpow.pop %v2420
      %v2422 = vmul.f32 %v2419, 1.442695
      %v2423 = vpow.pop %v2422
      %v2424 = vadd.f32 %v2421, 2.0
      %v2425 = vadd.f32 %v2423, 2.0
      %v2426 = vmul.f32 %v2421, %v2424
      %v2427 = vmul.f32 %v2423, %v2425
      %v2428 = vmul.f32 %v2416, %v2426
      %v2429 = vmul.f32 %v2417, %v2427
      %v2430 = vadd.f32 %v2426, 2.0
      %v2431 = vadd.f32 %v2427, 2.0
      %v2432 = vrcp.pop %v2430
      %v2433 = vmul.f32 %v2428, %v2432
      %v2434 = vrcp.pop %v2431
      %v2435 = vmul.f32 %v2429, %v2434
      %2436 = vst [vmem:[%s426] sm:$0xff] %v2433
      %2437 = vst [vmem:[%s426 + $0x8] sm:$0xff] %v2435
      %p2438 = scmp.lt.s32.totalorder %s24, 1
      %s2439 = scalar_select %p2438, %s24, 1
      %s2440 = smul.addr %s2439, 2
      %s2441 = smul.addr %s2440, 8
      %s2442 = scalar_lea.vmem %s11, %s2441
      %p2443 = scmp.lt.s32.totalorder %s24, 1
      %s2444 = scalar_select %p2443, %s24, 1
      %s2445 = smul.addr %s2444, 2
      %s2446 = smul.addr %s2445, 8
      %s2447 = scalar_lea.vmem %s12, %s2446
      // Predicated region
      $region65: #{ffc_block_apply.1} parent=63 // pred_check
        %p2448 = pneg %p278
      $region66: #{ffc_block_apply.1} parent=63 // pred_check_branch
        %2450 = sbr.rel (%p2448) target = $region68
      $region67: #{ffc_block_apply.1} parent=63 // pred_region
        _
      $region68: #{ffc_block_apply.1} parent=63 // pred_fallthru
        _
      // Predicated region
      $region69: #{ffc_block_apply.1} parent=63 // pred_check
        %p2451 = pneg %p304
      $region70: #{ffc_block_apply.1} parent=63 // pred_check_branch
        %2453 = sbr.rel (%p2451) target = $region72
      $region71: #{ffc_block_apply.1} parent=63 // pred_region
        _
      $region72: #{ffc_block_apply.1} parent=63 // pred_fallthru
        _
    $region64: #{ffc_block_apply.1} parent=5 // pred_fallthru
      _
    %p2454 = scmp.le.s32.totalorder 2, %s19
    // Predicated region
    $region73: #{ffc_block_apply.1} parent=5 // pred_check
      %p2455 = pneg %p2454
    $region74: #{ffc_block_apply.1} parent=5 // pred_check_branch
      %2457 = sbr.rel (%p2455) target = $region76
    $region75: #{ffc_block_apply.1} parent=5 // pred_region
      %s2458 = ssub.s32 %s19, 2
      // Predicated region
      $region77: #{ffc_block_apply.1} parent=75 // pred_check
        %p2459 = pneg %p284
      $region78: #{ffc_block_apply.1} parent=75 // pred_check_branch
        %2461 = sbr.rel (%p2459) target = $region80
      $region79: #{ffc_block_apply.1} parent=75 // pred_region
        %p2462 = scmp.lt.s32.totalorder %s25, 1
        %s2463 = scalar_select %p2462, %s25, 1
        %s2464 = smul.addr %s2463, 2
        %s2465 = smul.addr %s2464, 8
        %s2466 = scalar_lea.vmem %s11, %s2465
      $region80: #{ffc_block_apply.1} parent=75 // pred_fallthru
        _
      // Predicated region
      $region81: #{ffc_block_apply.1} parent=75 // pred_check
        %p2467 = pneg %p310
      $region82: #{ffc_block_apply.1} parent=75 // pred_check_branch
        %2469 = sbr.rel (%p2467) target = $region84
      $region83: #{ffc_block_apply.1} parent=75 // pred_region
        %p2470 = scmp.lt.s32.totalorder %s25, 1
        %s2471 = scalar_select %p2470, %s25, 1
        %s2472 = smul.addr %s2471, 2
        %s2473 = smul.addr %s2472, 8
        %s2474 = scalar_lea.vmem %s12, %s2473
      $region84: #{ffc_block_apply.1} parent=75 // pred_fallthru
        _
    $region76: #{ffc_block_apply.1} parent=5 // pred_fallthru
      _
  $region6: #{ffc_block_apply.1} parent=0 // loop_footer
    %s23 = sadd.s32 1, %s19
  $region7: #{ffc_block_apply.1} parent=0 // loop_footer_branch
    %18 = sbr.rel target = $region3
  $region8: #{ffc_block_apply.1} parent=0 // loop_exit
    _

</llo_original>
